<compile_context>
chip_gen: v5e
topology: v5e:2x2
jax: 0.10.0
libtpu: 0.0.40
codegen_flags: <defaults>
</compile_context>

<pallas_src>
import functools

import jax
import jax.numpy as jnp
from jax.experimental import pallas as pl
from jax.experimental.pallas import tpu as pltpu


def _conv_stats_kernel(x_ref, halo_ref, w_ref, conv_ref, mean_ref, rstd_ref,
                       sum_sc, ssq_sc, *,
                       K, s, TH, OW, Wq_p, n_tiles, inv_p, eps, tiled):
    """Grid = (batch, cout_blocks, row_tiles).

    x_ref:    (1, C_in, s, s, TH*Wq_p)     flattened-plane input row block
    halo_ref: (1, 1, C_in, s, s, He*Wq_p)  next few plane rows (tile halo)
    w_ref:    (K*K, co_blk, C_in)          conv weights, tap-major
    conv_ref: (1, co_blk, TH*Wq_p)         streamed conv output tile
    mean_ref: (1, co_blk, 1) f32           per (image, channel) mean
    rstd_ref: (1, co_blk, 1) f32           per (image, channel) 1/sqrt(var+eps)
    sum_sc / ssq_sc: (co_blk, 1) f32       streamed statistics scratch
    """
    t = pl.program_id(2)
    co_blk = sum_sc.shape[0]
    L = TH * Wq_p

    @pl.when(t == 0)
    def _init():
        sum_sc[...] = jnp.zeros_like(sum_sc)
        ssq_sc[...] = jnp.zeros_like(ssq_sc)

    # Per parity-plane flat row buffer (main rows ++ halo rows).  One lane-dense
    # concat per plane per tile; every tap then takes a cheap contiguous slice.
    planes = []
    for hr in range(s):
        row = []
        for wr in range(s):
            main = x_ref[0, :, hr, wr, :]                       # (C_in, L)
            if tiled:
                buf = jnp.concatenate(
                    [main, halo_ref[0, 0, :, hr, wr, :]], axis=-1)
            else:
                buf = main
            row.append(buf)
        planes.append(row)

    # K*K tap matmuls accumulated in f32 (static unroll: K is small here).
    acc = jnp.zeros((co_blk, L), jnp.float32)
    for ki in range(K):
        dh, hr = divmod(ki, s)
        for kj in range(K):
            cw, wr = divmod(kj, s)
            slab = planes[hr][wr][:, dh * Wq_p + cw:dh * Wq_p + cw + L]
            acc = acc + jnp.dot(w_ref[ki * K + kj], slab,
                                preferred_element_type=jnp.float32)

    # Streamed instance-norm statistics (lane-padded junk columns masked out).
    if OW == Wq_p:
        valid = acc
    else:
        lane = jax.lax.broadcasted_iota(jnp.int32, (1, L), 1)
        valid = jnp.where((lane % Wq_p) < OW, acc, 0.0)
    sum_sc[...] += jnp.sum(valid, axis=1, keepdims=True)
    ssq_sc[...] += jnp.sum(valid * valid, axis=1, keepdims=True)

    conv_ref[0] = acc.astype(conv_ref.dtype)                    # slab store

    @pl.when(t == n_tiles - 1)
    def _finalize():
        mean = sum_sc[...] * inv_p
        var = jnp.maximum(ssq_sc[...] * inv_p - mean * mean, 0.0)
        mean_ref[0] = mean
        rstd_ref[0] = jax.lax.rsqrt(var + eps)


def _instnorm_apply_kernel(conv_ref, mean_ref, rstd_ref, o_ref, *, OW):
    """Elementwise normalize pass.  conv_ref: (1, C_out, TH, Wq_p)."""
    y = conv_ref[0, :, :, :OW].astype(jnp.float32)
    mean = mean_ref[0][:, :, None]
    rstd = rstd_ref[0][:, :, None]
    o_ref[0] = ((y - mean) * rstd).astype(o_ref.dtype)


def conv_layer_pallas(x, weight, bias=None, *, kernel_size, stride, eps=1e-5,
                      tile_rows=None, cout_tile=None, compute_dtype=None):
    """ReflectionPad2d(K//2) -> Conv2d(K, stride) -> InstanceNorm2d(affine=False).

    x: (N, C_in, H, W); weight: (C_out, C_in, K, K).  `bias` is accepted for API
    parity but unused (exactly cancelled by the instance norm's mean subtraction).
    Pass compute_dtype=jnp.bfloat16 for ~3x MXU throughput (stats stay f32).
    """
    N, C_in, H, W = x.shape
    C_out = weight.shape[0]
    K, s = int(kernel_size), int(stride)
    pad = K // 2
    out_dtype = x.dtype
    del bias
    if compute_dtype is not None:
        x = x.astype(compute_dtype)
        weight = weight.astype(compute_dtype)

    # --- reflection pad (JAX glue, same materialization PyTorch does) --------
    xp = (jnp.pad(x, ((0, 0), (0, 0), (pad, pad), (pad, pad)), mode="reflect")
          if pad else x)
    Hp, Wp = H + 2 * pad, W + 2 * pad
    OH = (Hp - K) // s + 1
    OW = (Wp - K) // s + 1

    # --- stride-s "parity plane" (space-to-depth) layout ----------------------
    # xq[n, c, hr, wr, hq, wq] == xp[n, c, hq*s + hr, wq*s + wr]; every conv tap
    # then reads a dense slab of one plane, for any stride.
    Hq, Wq = -(-Hp // s), -(-Wp // s)
    halo = (K - 1) // s                 # plane rows a tile's taps reach past it
    halo_e = halo + 1                   # +1 row for the junk-column wrap
    Hq_pad = Hq + 1
    Wq_p = -(-Wq // 16) * 16            # lane pad => TH(*8)*Wq_p is 128-aligned
    xpp = jnp.pad(xp, ((0, 0), (0, 0), (0, Hq_pad * s - Hp), (0, Wq_p * s - Wp)))
    xq = xpp.reshape(N, C_in, Hq_pad, s, Wq_p, s).transpose(0, 1, 3, 5, 2, 4)

    # --- C_out blocking (keeps both v7x TensorCores busy at small batch) ------
    co_blk = C_out
    if cout_tile is not None and C_out % int(cout_tile) == 0 and \
            (int(cout_tile) % 8 == 0 or int(cout_tile) == C_out):
        co_blk = int(cout_tile)
    elif cout_tile is None and N == 1 and C_out % 16 == 0:
        co_blk = C_out // 2
    n_co = C_out // co_blk

    # --- VMEM budget (generation-aware) ---------------------------------------
    try:
        vmem_cap = getattr(pltpu.get_tpu_info(), "vmem_capacity_bytes",
                           64 * 1024 * 1024)
    except Exception:  # pragma: no cover - conservative fallback
        vmem_cap = 64 * 1024 * 1024
    vmem_limit = min(int(vmem_cap * 0.75), 100 * 1024 * 1024)
    budget = max(vmem_limit // 3, 4 * 1024 * 1024)
    isz = x.dtype.itemsize

    def _est(th):
        in_blk = C_in * s * s * th * Wq_p * isz
        out_blk = co_blk * th * Wq_p * isz
        return (4 * in_blk + 2 * C_in * s * s * halo_e * Wq_p * isz
                + 2 * out_blk + co_blk * th * Wq_p * 4
                + 2 * K * K * co_blk * C_in * isz)

    # --- output-row tile size --------------------------------------------------
    cands = [d for d in range(8, OH + 1, 8) if OH % d == 0]
    if tile_rows is not None and OH % int(tile_rows) == 0 and int(tile_rows) % 8 == 0:
        TH, tiled = int(tile_rows), True
    elif cands:
        fitting = [d for d in cands if _est(d) <= budget]
        TH, tiled = (max(fitting) if fitting else cands[0]), True
    else:
        TH, tiled = OH, False           # whole-image fallback (small OH shapes)
    n_tiles = OH // TH if tiled else 1

    # --- tiny halo array: plane rows just past each row block ------------------
    if tiled:
        starts = (jnp.arange(n_tiles) + 1) * TH
        hrows = jnp.clip(starts[:, None] + jnp.arange(halo_e)[None, :], 0, Hq_pad - 1)
        halos = jnp.take(xq, hrows.reshape(-1), axis=4)
        halos = halos.reshape(N, C_in, s, s, n_tiles, halo_e, Wq_p)
        halos = halos.transpose(0, 4, 1, 2, 3, 5, 6).reshape(
            N, n_tiles, C_in, s, s, halo_e * Wq_p)
        halo_spec = pl.BlockSpec((1, 1, C_in, s, s, halo_e * Wq_p),
                                 lambda n, co, t: (n, t, 0, 0, 0, 0))
        x_spec = pl.BlockSpec((1, C_in, s, s, TH * Wq_p),
                              lambda n, co, t: (n, 0, 0, 0, t))
    else:
        halos = jnp.zeros((N, 1, C_in, s, s, Wq_p), x.dtype)   # unused dummy
        halo_spec = pl.BlockSpec((1, 1, C_in, s, s, Wq_p),
                                 lambda n, co, t: (n, 0, 0, 0, 0, 0))
        x_spec = pl.BlockSpec((1, C_in, s, s, Hq_pad * Wq_p),
                              lambda n, co, t: (n, 0, 0, 0, 0))

    xq_flat = xq.reshape(N, C_in, s, s, Hq_pad * Wq_p)
    w_taps = jnp.transpose(weight, (2, 3, 0, 1)).reshape(K * K, C_out, C_in)

    # --- phase 1: conv + streamed per-channel statistics -----------------------
    kernel1 = functools.partial(
        _conv_stats_kernel, K=K, s=s, TH=TH, OW=OW, Wq_p=Wq_p, n_tiles=n_tiles,
        inv_p=1.0 / float(OH * OW), eps=float(eps), tiled=tiled)

    conv_flat, mean, rstd = pl.pallas_call(
        kernel1,
        out_shape=(jax.ShapeDtypeStruct((N, C_out, OH * Wq_p), x.dtype),
                   jax.ShapeDtypeStruct((N, C_out, 1), jnp.float32),
                   jax.ShapeDtypeStruct((N, C_out, 1), jnp.float32)),
        grid_spec=pltpu.PrefetchScalarGridSpec(
            num_scalar_prefetch=0,
            grid=(N, n_co, n_tiles),
            in_specs=[
                x_spec,
                halo_spec,
                pl.BlockSpec((K * K, co_blk, C_in), lambda n, co, t: (0, co, 0)),
            ],
            out_specs=[
                pl.BlockSpec((1, co_blk, TH * Wq_p), lambda n, co, t: (n, co, t)),
                pl.BlockSpec((1, co_blk, 1), lambda n, co, t: (n, co, 0)),
                pl.BlockSpec((1, co_blk, 1), lambda n, co, t: (n, co, 0)),
            ],
            scratch_shapes=[pltpu.VMEM((co_blk, 1), jnp.float32),
                            pltpu.VMEM((co_blk, 1), jnp.float32)]),
        compiler_params=pltpu.CompilerParams(
            dimension_semantics=("parallel", "parallel", "arbitrary"),
            vmem_limit_bytes=vmem_limit),
    )(xq_flat, halos, w_taps)

    # --- phase 2: cheap elementwise normalize (drops the lane padding) ---------
    conv4 = conv_flat.reshape(N, C_out, OH, Wq_p)
    out = pl.pallas_call(
        functools.partial(_instnorm_apply_kernel, OW=OW),
        out_shape=jax.ShapeDtypeStruct((N, C_out, OH, OW), out_dtype),
        grid_spec=pltpu.PrefetchScalarGridSpec(
            num_scalar_prefetch=0,
            grid=(N, n_tiles),
            in_specs=[
                pl.BlockSpec((1, C_out, TH, Wq_p), lambda n, t: (n, 0, t, 0)),
                pl.BlockSpec((1, C_out, 1), lambda n, t: (n, 0, 0)),
                pl.BlockSpec((1, C_out, 1), lambda n, t: (n, 0, 0)),
            ],
            out_specs=pl.BlockSpec((1, C_out, TH, OW), lambda n, t: (n, 0, t, 0))),
        compiler_params=pltpu.CompilerParams(
            dimension_semantics=("parallel", "arbitrary"),
            vmem_limit_bytes=vmem_limit),
    )(conv4, mean, rstd)
    return out


def _reference(x, weight, bias, *, kernel_size, stride, eps=1e-5):
    """Pure-JAX reference mirroring the PyTorch module (including the bias)."""
    pad = kernel_size // 2
    xp = (jnp.pad(x, ((0, 0), (0, 0), (pad, pad), (pad, pad)), mode="reflect")
          if pad else x)
    conv = jax.lax.conv_general_dilated(
        xp, weight, window_strides=(stride, stride), padding="VALID",
        dimension_numbers=("NCHW", "OIHW", "NCHW"))
    conv = conv + bias[None, :, None, None]
    mean = jnp.mean(conv, axis=(2, 3), keepdims=True)
    var = jnp.mean((conv - mean) ** 2, axis=(2, 3), keepdims=True)
    return (conv - mean) * jax.lax.rsqrt(var + eps)


if __name__ == "__main__":
    N, C_in, H, W = 2, 4, 16, 16
    C_out, K = 16, 3

    key = jax.random.PRNGKey(0)
    kx, kw, kb = jax.random.split(key, 3)
    x = jax.random.normal(kx, (N, C_in, H, W), dtype=jnp.float32)
    fan_in = C_in * K * K
    bound = 1.0 / (fan_in ** 0.5)
    weight = jax.random.uniform(kw, (C_out, C_in, K, K), jnp.float32, -bound, bound)
    bias = jax.random.uniform(kb, (C_out,), jnp.float32, -bound, bound)

    # tile_rows=8 / cout_tile=8 exercise the streamed-statistics row tiling and
    # the C_out-block grid axis even at this toy size.
    for stride in (1, 2):
        run = jax.jit(functools.partial(conv_layer_pallas, kernel_size=K,
                                        stride=stride, tile_rows=8, cout_tile=8))
        out = jax.block_until_ready(run(x, weight, bias))
        ref = _reference(x, weight, bias, kernel_size=K, stride=stride)
        assert out.shape == ref.shape == (N, C_out, H // stride, W // stride)
        err = float(jnp.max(jnp.abs(out - ref)))
        assert err < 1e-3, f"stride={stride}: mismatch vs reference: {err}"

    print("KERNEL_OK")
</pallas_src>

<mosaic_0001>
module attributes {stable_mosaic.version = 11 : i64} {
  func.func @_conv_stats_kernel(%arg0: i32, %arg1: i32, %arg2: i32, %arg3: memref<1x4x1x1x256xf32, #tpu.memory_space<vmem>>, %arg4: memref<1x1x4x1x1x96xf32, #tpu.memory_space<vmem>>, %arg5: memref<9x8x4xf32, #tpu.memory_space<vmem>>, %arg6: memref<1x8x256xf32, #tpu.memory_space<vmem>>, %arg7: memref<1x8x1xf32, #tpu.memory_space<vmem>>, %arg8: memref<1x8x1xf32, #tpu.memory_space<vmem>>, %arg9: memref<8x1xf32, #tpu.memory_space<vmem>>, %arg10: memref<8x1xf32, #tpu.memory_space<vmem>>) attributes {dimension_semantics = [#tpu.dimension_semantics<parallel>, #tpu.dimension_semantics<parallel>, #tpu.dimension_semantics<arbitrary>], iteration_bounds = array<i64: 2, 2, 2>, scalar_prefetch = 0 : i64, scratch_operands = 2 : i64, tpu.core_type = #tpu.core_type<tc>, window_params = [{transform_indices = @transform_0, window_bounds = array<i64: 1, 4, 1, 1, 256>}, {transform_indices = @transform_1, window_bounds = array<i64: 1, 1, 4, 1, 1, 96>}, {transform_indices = @transform_2, window_bounds = array<i64: 9, 8, 4>}, {transform_indices = @transform_3, window_bounds = array<i64: 1, 8, 256>}, {transform_indices = @transform_4, window_bounds = array<i64: 1, 8, 1>}, {transform_indices = @transform_5, window_bounds = array<i64: 1, 8, 1>}]} {
    %c0_i32 = arith.constant 0 : i32
    %0 = arith.cmpi eq, %arg2, %c0_i32 : i32
    %1 = arith.extui %0 : i1 to i32
    %c0_i32_0 = arith.constant 0 : i32
    %2 = arith.cmpi ne, %1, %c0_i32_0 : i32
    scf.if %2 {
      %cst_59 = arith.constant 0.000000e+00 : f32
      %94 = vector.broadcast %cst_59 : f32 to vector<8x1xf32>
      %c0_60 = arith.constant 0 : index
      %c0_61 = arith.constant 0 : index
      %95 = vector.load %arg9[%c0_60, %c0_61] : memref<8x1xf32, #tpu.memory_space<vmem>>, vector<8x1xf32>
      tpu.vector_store %arg9[%c0_60, %c0_61], %94 {strides = array<i32>} : memref<8x1xf32, #tpu.memory_space<vmem>>, vector<8x1xf32>,
      %cst_62 = arith.constant 0.000000e+00 : f32
      %96 = vector.broadcast %cst_62 : f32 to vector<8x1xf32>
      %c0_63 = arith.constant 0 : index
      %c0_64 = arith.constant 0 : index
      %97 = vector.load %arg10[%c0_63, %c0_64] : memref<8x1xf32, #tpu.memory_space<vmem>>, vector<8x1xf32>
      tpu.vector_store %arg10[%c0_63, %c0_64], %96 {strides = array<i32>} : memref<8x1xf32, #tpu.memory_space<vmem>>, vector<8x1xf32>,
    } else {
    }
    %c0 = arith.constant 0 : index
    %c0_1 = arith.constant 0 : index
    %c0_2 = arith.constant 0 : index
    %c0_3 = arith.constant 0 : index
    %c0_4 = arith.constant 0 : index
    %3 = vector.load %arg3[%c0, %c0_1, %c0_2, %c0_3, %c0_4] : memref<1x4x1x1x256xf32, #tpu.memory_space<vmem>>, vector<1x4x1x1x256xf32>
    %4 = vector.shape_cast %3 : vector<1x4x1x1x256xf32> to vector<4x256xf32>
    %c0_5 = arith.constant 0 : index
    %c0_6 = arith.constant 0 : index
    %c0_7 = arith.constant 0 : index
    %c0_8 = arith.constant 0 : index
    %c0_9 = arith.constant 0 : index
    %c0_10 = arith.constant 0 : index
    %5 = vector.load %arg4[%c0_5, %c0_6, %c0_7, %c0_8, %c0_9, %c0_10] : memref<1x1x4x1x1x96xf32, #tpu.memory_space<vmem>>, vector<1x1x4x1x1x96xf32>
    %6 = vector.shape_cast %5 : vector<1x1x4x1x1x96xf32> to vector<4x96xf32>
    %7 = tpu.concatenate %4, %6 in 1 : vector<4x256xf32>, vector<4x96xf32> -> vector<4x352xf32>
    %cst = arith.constant 0.000000e+00 : f32
    %8 = vector.broadcast %cst : f32 to vector<8x256xf32>
    %9 = vector.extract_strided_slice %7 {offsets = [0, 0], sizes = [4, 256], strides = [1, 1]} : vector<4x352xf32> to vector<4x256xf32>
    %c0_11 = arith.constant 0 : index
    %c0_12 = arith.constant 0 : index
    %c0_13 = arith.constant 0 : index
    %10 = vector.load %arg5[%c0_11, %c0_12, %c0_13] : memref<9x8x4xf32, #tpu.memory_space<vmem>>, vector<1x8x4xf32>
    %11 = vector.shape_cast %10 : vector<1x8x4xf32> to vector<8x4xf32>
    %cst_14 = arith.constant dense<0.000000e+00> : vector<8x256xf32>
    %12 = tpu.matmul %11, %9, %cst_14 {dimension_numbers = #tpu.dot_dimension_numbers<[1], [0], [0], [1], [0, 0, 1, 1], [], []>} : vector<8x4xf32>, vector<4x256xf32>, vector<8x256xf32> -> vector<8x256xf32>
    %13 = arith.addf %8, %12 : vector<8x256xf32>
    %14 = vector.extract_strided_slice %7 {offsets = [0, 1], sizes = [4, 256], strides = [1, 1]} : vector<4x352xf32> to vector<4x256xf32>
    %c1 = arith.constant 1 : index
    %c0_15 = arith.constant 0 : index
    %c0_16 = arith.constant 0 : index
    %15 = vector.load %arg5[%c1, %c0_15, %c0_16] : memref<9x8x4xf32, #tpu.memory_space<vmem>>, vector<1x8x4xf32>
    %16 = vector.shape_cast %15 : vector<1x8x4xf32> to vector<8x4xf32>
    %cst_17 = arith.constant dense<0.000000e+00> : vector<8x256xf32>
    %17 = tpu.matmul %16, %14, %cst_17 {dimension_numbers = #tpu.dot_dimension_numbers<[1], [0], [0], [1], [0, 0, 1, 1], [], []>} : vector<8x4xf32>, vector<4x256xf32>, vector<8x256xf32> -> vector<8x256xf32>
    %18 = arith.addf %13, %17 : vector<8x256xf32>
    %19 = vector.extract_strided_slice %7 {offsets = [0, 2], sizes = [4, 256], strides = [1, 1]} : vector<4x352xf32> to vector<4x256xf32>
    %c2 = arith.constant 2 : index
    %c0_18 = arith.constant 0 : index
    %c0_19 = arith.constant 0 : index
    %20 = vector.load %arg5[%c2, %c0_18, %c0_19] : memref<9x8x4xf32, #tpu.memory_space<vmem>>, vector<1x8x4xf32>
    %21 = vector.shape_cast %20 : vector<1x8x4xf32> to vector<8x4xf32>
    %cst_20 = arith.constant dense<0.000000e+00> : vector<8x256xf32>
    %22 = tpu.matmul %21, %19, %cst_20 {dimension_numbers = #tpu.dot_dimension_numbers<[1], [0], [0], [1], [0, 0, 1, 1], [], []>} : vector<8x4xf32>, vector<4x256xf32>, vector<8x256xf32> -> vector<8x256xf32>
    %23 = arith.addf %18, %22 : vector<8x256xf32>
    %24 = vector.extract_strided_slice %7 {offsets = [0, 32], sizes = [4, 256], strides = [1, 1]} : vector<4x352xf32> to vector<4x256xf32>
    %c3 = arith.constant 3 : index
    %c0_21 = arith.constant 0 : index
    %c0_22 = arith.constant 0 : index
    %25 = vector.load %arg5[%c3, %c0_21, %c0_22] : memref<9x8x4xf32, #tpu.memory_space<vmem>>, vector<1x8x4xf32>
    %26 = vector.shape_cast %25 : vector<1x8x4xf32> to vector<8x4xf32>
    %cst_23 = arith.constant dense<0.000000e+00> : vector<8x256xf32>
    %27 = tpu.matmul %26, %24, %cst_23 {dimension_numbers = #tpu.dot_dimension_numbers<[1], [0], [0], [1], [0, 0, 1, 1], [], []>} : vector<8x4xf32>, vector<4x256xf32>, vector<8x256xf32> -> vector<8x256xf32>
    %28 = arith.addf %23, %27 : vector<8x256xf32>
    %29 = vector.extract_strided_slice %7 {offsets = [0, 33], sizes = [4, 256], strides = [1, 1]} : vector<4x352xf32> to vector<4x256xf32>
    %c4 = arith.constant 4 : index
    %c0_24 = arith.constant 0 : index
    %c0_25 = arith.constant 0 : index
    %30 = vector.load %arg5[%c4, %c0_24, %c0_25] : memref<9x8x4xf32, #tpu.memory_space<vmem>>, vector<1x8x4xf32>
    %31 = vector.shape_cast %30 : vector<1x8x4xf32> to vector<8x4xf32>
    %cst_26 = arith.constant dense<0.000000e+00> : vector<8x256xf32>
    %32 = tpu.matmul %31, %29, %cst_26 {dimension_numbers = #tpu.dot_dimension_numbers<[1], [0], [0], [1], [0, 0, 1, 1], [], []>} : vector<8x4xf32>, vector<4x256xf32>, vector<8x256xf32> -> vector<8x256xf32>
    %33 = arith.addf %28, %32 : vector<8x256xf32>
    %34 = vector.extract_strided_slice %7 {offsets = [0, 34], sizes = [4, 256], strides = [1, 1]} : vector<4x352xf32> to vector<4x256xf32>
    %c5 = arith.constant 5 : index
    %c0_27 = arith.constant 0 : index
    %c0_28 = arith.constant 0 : index
    %35 = vector.load %arg5[%c5, %c0_27, %c0_28] : memref<9x8x4xf32, #tpu.memory_space<vmem>>, vector<1x8x4xf32>
    %36 = vector.shape_cast %35 : vector<1x8x4xf32> to vector<8x4xf32>
    %cst_29 = arith.constant dense<0.000000e+00> : vector<8x256xf32>
    %37 = tpu.matmul %36, %34, %cst_29 {dimension_numbers = #tpu.dot_dimension_numbers<[1], [0], [0], [1], [0, 0, 1, 1], [], []>} : vector<8x4xf32>, vector<4x256xf32>, vector<8x256xf32> -> vector<8x256xf32>
    %38 = arith.addf %33, %37 : vector<8x256xf32>
    %39 = vector.extract_strided_slice %7 {offsets = [0, 64], sizes = [4, 256], strides = [1, 1]} : vector<4x352xf32> to vector<4x256xf32>
    %c6 = arith.constant 6 : index
    %c0_30 = arith.constant 0 : index
    %c0_31 = arith.constant 0 : index
    %40 = vector.load %arg5[%c6, %c0_30, %c0_31] : memref<9x8x4xf32, #tpu.memory_space<vmem>>, vector<1x8x4xf32>
    %41 = vector.shape_cast %40 : vector<1x8x4xf32> to vector<8x4xf32>
    %cst_32 = arith.constant dense<0.000000e+00> : vector<8x256xf32>
    %42 = tpu.matmul %41, %39, %cst_32 {dimension_numbers = #tpu.dot_dimension_numbers<[1], [0], [0], [1], [0, 0, 1, 1], [], []>} : vector<8x4xf32>, vector<4x256xf32>, vector<8x256xf32> -> vector<8x256xf32>
    %43 = arith.addf %38, %42 : vector<8x256xf32>
    %44 = vector.extract_strided_slice %7 {offsets = [0, 65], sizes = [4, 256], strides = [1, 1]} : vector<4x352xf32> to vector<4x256xf32>
    %c7 = arith.constant 7 : index
    %c0_33 = arith.constant 0 : index
    %c0_34 = arith.constant 0 : index
    %45 = vector.load %arg5[%c7, %c0_33, %c0_34] : memref<9x8x4xf32, #tpu.memory_space<vmem>>, vector<1x8x4xf32>
    %46 = vector.shape_cast %45 : vector<1x8x4xf32> to vector<8x4xf32>
    %cst_35 = arith.constant dense<0.000000e+00> : vector<8x256xf32>
    %47 = tpu.matmul %46, %44, %cst_35 {dimension_numbers = #tpu.dot_dimension_numbers<[1], [0], [0], [1], [0, 0, 1, 1], [], []>} : vector<8x4xf32>, vector<4x256xf32>, vector<8x256xf32> -> vector<8x256xf32>
    %48 = arith.addf %43, %47 : vector<8x256xf32>
    %49 = vector.extract_strided_slice %7 {offsets = [0, 66], sizes = [4, 256], strides = [1, 1]} : vector<4x352xf32> to vector<4x256xf32>
    %c8 = arith.constant 8 : index
    %c0_36 = arith.constant 0 : index
    %c0_37 = arith.constant 0 : index
    %50 = vector.load %arg5[%c8, %c0_36, %c0_37] : memref<9x8x4xf32, #tpu.memory_space<vmem>>, vector<1x8x4xf32>
    %51 = vector.shape_cast %50 : vector<1x8x4xf32> to vector<8x4xf32>
    %cst_38 = arith.constant dense<0.000000e+00> : vector<8x256xf32>
    %52 = tpu.matmul %51, %49, %cst_38 {dimension_numbers = #tpu.dot_dimension_numbers<[1], [0], [0], [1], [0, 0, 1, 1], [], []>} : vector<8x4xf32>, vector<4x256xf32>, vector<8x256xf32> -> vector<8x256xf32>
    %53 = arith.addf %48, %52 : vector<8x256xf32>
    %54 = tpu.iota {dimensions = array<i32: 1>} : vector<1x256xi32>
    %c32_i32 = arith.constant 32 : i32
    %c0_i32_39 = arith.constant 0 : i32
    %55 = arith.cmpi eq, %c32_i32, %c0_i32_39 : i32
    %c1_i32 = arith.constant 1 : i32
    %56 = arith.select %55, %c1_i32, %c32_i32 : i32
    %57 = vector.broadcast %56 : i32 to vector<1x256xi32>
    %58 = arith.remsi %54, %57 : vector<1x256xi32>
    %c0_i32_40 = arith.constant 0 : i32
    %59 = vector.broadcast %c0_i32_40 : i32 to vector<1x256xi32>
    %60 = arith.cmpi ne, %58, %59 : vector<1x256xi32>
    %c0_i32_41 = arith.constant 0 : i32
    %61 = vector.broadcast %c0_i32_41 : i32 to vector<1x256xi32>
    %62 = arith.cmpi slt, %58, %61 : vector<1x256xi32>
    %c0_i32_42 = arith.constant 0 : i32
    %63 = arith.cmpi slt, %56, %c0_i32_42 : i32
    %64 = vector.broadcast %63 : i1 to vector<1x256xi1>
    %65 = vector.broadcast %64 : vector<1x256xi1> to vector<1x256xi1>
    %66 = arith.xori %62, %65 : vector<1x256xi1>
    %67 = arith.andi %66, %60 : vector<1x256xi1>
    %68 = vector.broadcast %56 : i32 to vector<1x256xi32>
    %69 = arith.addi %58, %68 : vector<1x256xi32>
    %70 = arith.select %67, %69, %58 : vector<1x256xi1>, vector<1x256xi32>
    %c16_i32 = arith.constant 16 : i32
    %71 = vector.broadcast %c16_i32 : i32 to vector<1x256xi32>
    %72 = arith.cmpi slt, %70, %71 : vector<1x256xi32>
    %cst_43 = arith.constant 0.000000e+00 : f32
    %73 = vector.shape_cast %72 : vector<1x256xi1> to vector<1x256xi1>
    %74 = vector.broadcast %73 : vector<1x256xi1> to vector<8x256xi1>
    %75 = vector.broadcast %cst_43 : f32 to vector<8x256xf32>
    %76 = arith.select %74, %53, %75 : vector<8x256xi1>, vector<8x256xf32>
    %c0_44 = arith.constant 0 : index
    %c0_45 = arith.constant 0 : index
    %77 = vector.load %arg9[%c0_44, %c0_45] : memref<8x1xf32, #tpu.memory_space<vmem>>, vector<8x1xf32>
    %cst_46 = arith.constant dense<0.000000e+00> : vector<8xf32>
    %78 = vector.multi_reduction <add>, %76, %cst_46 [1] : vector<8x256xf32> to vector<8xf32>
    %79 = vector.shape_cast %78 : vector<8xf32> to vector<8x1xf32>
    %80 = arith.addf %77, %79 : vector<8x1xf32>
    %c0_47 = arith.constant 0 : index
    %c0_48 = arith.constant 0 : index
    %81 = vector.load %arg9[%c0_47, %c0_48] : memref<8x1xf32, #tpu.memory_space<vmem>>, vector<8x1xf32>
    tpu.vector_store %arg9[%c0_47, %c0_48], %80 {strides = array<i32>} : memref<8x1xf32, #tpu.memory_space<vmem>>, vector<8x1xf32>,
    %c0_49 = arith.constant 0 : index
    %c0_50 = arith.constant 0 : index
    %82 = vector.load %arg10[%c0_49, %c0_50] : memref<8x1xf32, #tpu.memory_space<vmem>>, vector<8x1xf32>
    %83 = arith.mulf %76, %76 : vector<8x256xf32>
    %cst_51 = arith.constant dense<0.000000e+00> : vector<8xf32>
    %84 = vector.multi_reduction <add>, %83, %cst_51 [1] : vector<8x256xf32> to vector<8xf32>
    %85 = vector.shape_cast %84 : vector<8xf32> to vector<8x1xf32>
    %86 = arith.addf %82, %85 : vector<8x1xf32>
    %c0_52 = arith.constant 0 : index
    %c0_53 = arith.constant 0 : index
    %87 = vector.load %arg10[%c0_52, %c0_53] : memref<8x1xf32, #tpu.memory_space<vmem>>, vector<8x1xf32>
    tpu.vector_store %arg10[%c0_52, %c0_53], %86 {strides = array<i32>} : memref<8x1xf32, #tpu.memory_space<vmem>>, vector<8x1xf32>,
    %c0_54 = arith.constant 0 : index
    %c0_55 = arith.constant 0 : index
    %c0_56 = arith.constant 0 : index
    %88 = vector.load %arg6[%c0_54, %c0_55, %c0_56] : memref<1x8x256xf32, #tpu.memory_space<vmem>>, vector<1x8x256xf32>
    %89 = vector.shape_cast %88 : vector<1x8x256xf32> to vector<8x256xf32>
    %90 = vector.shape_cast %53 : vector<8x256xf32> to vector<1x8x256xf32>
    tpu.vector_store %arg6[%c0_54, %c0_55, %c0_56], %90 {strides = array<i32>} : memref<1x8x256xf32, #tpu.memory_space<vmem>>, vector<1x8x256xf32>,
    %c1_i32_57 = arith.constant 1 : i32
    %91 = arith.cmpi eq, %arg2, %c1_i32_57 : i32
    %92 = arith.extui %91 : i1 to i32
    %c0_i32_58 = arith.constant 0 : i32
    %93 = arith.cmpi ne, %92, %c0_i32_58 : i32
    scf.if %93 {
      %c0_59 = arith.constant 0 : index
      %c0_60 = arith.constant 0 : index
      %94 = vector.load %arg9[%c0_59, %c0_60] : memref<8x1xf32, #tpu.memory_space<vmem>>, vector<8x1xf32>
      %cst_61 = arith.constant 3.906250e-03 : f32
      %95 = vector.broadcast %cst_61 : f32 to vector<8x1xf32>
      %96 = arith.mulf %94, %95 : vector<8x1xf32>
      %c0_62 = arith.constant 0 : index
      %c0_63 = arith.constant 0 : index
      %97 = vector.load %arg10[%c0_62, %c0_63] : memref<8x1xf32, #tpu.memory_space<vmem>>, vector<8x1xf32>
      %cst_64 = arith.constant 3.906250e-03 : f32
      %98 = vector.broadcast %cst_64 : f32 to vector<8x1xf32>
      %99 = arith.mulf %97, %98 : vector<8x1xf32>
      %100 = arith.mulf %96, %96 : vector<8x1xf32>
      %101 = arith.subf %99, %100 : vector<8x1xf32>
      %cst_65 = arith.constant 0.000000e+00 : f32
      %102 = vector.broadcast %cst_65 : f32 to vector<8x1xf32>
      %103 = arith.maximumf %101, %102 : vector<8x1xf32>
      %c0_66 = arith.constant 0 : index
      %c0_67 = arith.constant 0 : index
      %c0_68 = arith.constant 0 : index
      %104 = vector.load %arg7[%c0_66, %c0_67, %c0_68] : memref<1x8x1xf32, #tpu.memory_space<vmem>>, vector<1x8x1xf32>
      %105 = vector.shape_cast %104 : vector<1x8x1xf32> to vector<8x1xf32>
      %106 = vector.shape_cast %96 : vector<8x1xf32> to vector<1x8x1xf32>
      tpu.vector_store %arg7[%c0_66, %c0_67, %c0_68], %106 {strides = array<i32>} : memref<1x8x1xf32, #tpu.memory_space<vmem>>, vector<1x8x1xf32>,
      %cst_69 = arith.constant 9.99999974E-6 : f32
      %107 = vector.broadcast %cst_69 : f32 to vector<8x1xf32>
      %108 = arith.addf %103, %107 : vector<8x1xf32>
      %109 = math.rsqrt %108 : vector<8x1xf32>
      %c0_70 = arith.constant 0 : index
      %c0_71 = arith.constant 0 : index
      %c0_72 = arith.constant 0 : index
      %110 = vector.load %arg8[%c0_70, %c0_71, %c0_72] : memref<1x8x1xf32, #tpu.memory_space<vmem>>, vector<1x8x1xf32>
      %111 = vector.shape_cast %110 : vector<1x8x1xf32> to vector<8x1xf32>
      %112 = vector.shape_cast %109 : vector<8x1xf32> to vector<1x8x1xf32>
      tpu.vector_store %arg8[%c0_70, %c0_71, %c0_72], %112 {strides = array<i32>} : memref<1x8x1xf32, #tpu.memory_space<vmem>>, vector<1x8x1xf32>,
    } else {
    }
    return
  }
  func.func @transform_0(%arg0: i32, %arg1: i32, %arg2: i32) -> (i32, i32, i32, i32, i32) {
    %c0_i32 = arith.constant 0 : i32
    %c0_i32_0 = arith.constant 0 : i32
    %c0_i32_1 = arith.constant 0 : i32
    %c0_i32_2 = arith.constant 0 : i32
    return %arg0, %c0_i32, %c0_i32_0, %c0_i32_1, %arg2 : i32, i32, i32, i32, i32
  }
  func.func @transform_1(%arg0: i32, %arg1: i32, %arg2: i32) -> (i32, i32, i32, i32, i32, i32) {
    %c0_i32 = arith.constant 0 : i32
    %c0_i32_0 = arith.constant 0 : i32
    %c0_i32_1 = arith.constant 0 : i32
    %c0_i32_2 = arith.constant 0 : i32
    %c0_i32_3 = arith.constant 0 : i32
    return %arg0, %arg2, %c0_i32, %c0_i32_0, %c0_i32_1, %c0_i32_2 : i32, i32, i32, i32, i32, i32
  }
  func.func @transform_2(%arg0: i32, %arg1: i32, %arg2: i32) -> (i32, i32, i32) {
    %c0_i32 = arith.constant 0 : i32
    %c0_i32_0 = arith.constant 0 : i32
    %c0_i32_1 = arith.constant 0 : i32
    return %c0_i32, %arg1, %c0_i32_0 : i32, i32, i32
  }
  func.func @transform_3(%arg0: i32, %arg1: i32, %arg2: i32) -> (i32, i32, i32) {
    %c0_i32 = arith.constant 0 : i32
    return %arg0, %arg1, %arg2 : i32, i32, i32
  }
  func.func @transform_4(%arg0: i32, %arg1: i32, %arg2: i32) -> (i32, i32, i32) {
    %c0_i32 = arith.constant 0 : i32
    %c0_i32_0 = arith.constant 0 : i32
    return %arg0, %arg1, %c0_i32 : i32, i32, i32
  }
  func.func @transform_5(%arg0: i32, %arg1: i32, %arg2: i32) -> (i32, i32, i32) {
    %c0_i32 = arith.constant 0 : i32
    %c0_i32_0 = arith.constant 0 : i32
    return %arg0, %arg1, %c0_i32 : i32, i32, i32
  }
}

module attributes {stable_mosaic.version = 11 : i64} {
  func.func @_instnorm_apply_kernel(%arg0: i32, %arg1: i32, %arg2: memref<1x16x8x32xf32, #tpu.memory_space<vmem>>, %arg3: memref<1x16x1xf32, #tpu.memory_space<vmem>>, %arg4: memref<1x16x1xf32, #tpu.memory_space<vmem>>, %arg5: memref<1x16x8x16xf32, #tpu.memory_space<vmem>>) attributes {dimension_semantics = [#tpu.dimension_semantics<parallel>, #tpu.dimension_semantics<arbitrary>], iteration_bounds = array<i64: 2, 2>, scalar_prefetch = 0 : i64, scratch_operands = 0 : i64, tpu.core_type = #tpu.core_type<tc>, window_params = [{transform_indices = @transform_0, window_bounds = array<i64: 1, 16, 8, 32>}, {transform_indices = @transform_1, window_bounds = array<i64: 1, 16, 1>}, {transform_indices = @transform_2, window_bounds = array<i64: 1, 16, 1>}, {transform_indices = @transform_3, window_bounds = array<i64: 1, 16, 8, 16>}]} {
    %c0 = arith.constant 0 : index
    %c0_0 = arith.constant 0 : index
    %c0_1 = arith.constant 0 : index
    %c0_2 = arith.constant 0 : index
    %0 = vector.load %arg2[%c0, %c0_0, %c0_1, %c0_2] : memref<1x16x8x32xf32, #tpu.memory_space<vmem>>, vector<1x16x8x16xf32>
    %1 = vector.shape_cast %0 : vector<1x16x8x16xf32> to vector<16x8x16xf32>
    %c0_3 = arith.constant 0 : index
    %c0_4 = arith.constant 0 : index
    %c0_5 = arith.constant 0 : index
    %2 = vector.load %arg3[%c0_3, %c0_4, %c0_5] : memref<1x16x1xf32, #tpu.memory_space<vmem>>, vector<1x16x1xf32>
    %3 = vector.shape_cast %2 : vector<1x16x1xf32> to vector<16x1xf32>
    %4 = vector.shape_cast %3 : vector<16x1xf32> to vector<16x1x1xf32>
    %c0_6 = arith.constant 0 : index
    %c0_7 = arith.constant 0 : index
    %c0_8 = arith.constant 0 : index
    %5 = vector.load %arg4[%c0_6, %c0_7, %c0_8] : memref<1x16x1xf32, #tpu.memory_space<vmem>>, vector<1x16x1xf32>
    %6 = vector.shape_cast %5 : vector<1x16x1xf32> to vector<16x1xf32>
    %7 = vector.shape_cast %6 : vector<16x1xf32> to vector<16x1x1xf32>
    %8 = vector.broadcast %4 : vector<16x1x1xf32> to vector<16x8x16xf32>
    %9 = arith.subf %1, %8 : vector<16x8x16xf32>
    %10 = vector.broadcast %7 : vector<16x1x1xf32> to vector<16x8x16xf32>
    %11 = arith.mulf %9, %10 : vector<16x8x16xf32>
    %c0_9 = arith.constant 0 : index
    %c0_10 = arith.constant 0 : index
    %c0_11 = arith.constant 0 : index
    %c0_12 = arith.constant 0 : index
    %12 = vector.load %arg5[%c0_9, %c0_10, %c0_11, %c0_12] : memref<1x16x8x16xf32, #tpu.memory_space<vmem>>, vector<1x16x8x16xf32>
    %13 = vector.shape_cast %12 : vector<1x16x8x16xf32> to vector<16x8x16xf32>
    %14 = vector.shape_cast %11 : vector<16x8x16xf32> to vector<1x16x8x16xf32>
    tpu.vector_store %arg5[%c0_9, %c0_10, %c0_11, %c0_12], %14 {strides = array<i32>} : memref<1x16x8x16xf32, #tpu.memory_space<vmem>>, vector<1x16x8x16xf32>,
    return
  }
  func.func @transform_0(%arg0: i32, %arg1: i32) -> (i32, i32, i32, i32) {
    %c0_i32 = arith.constant 0 : i32
    %c0_i32_0 = arith.constant 0 : i32
    %c0_i32_1 = arith.constant 0 : i32
    return %arg0, %c0_i32, %arg1, %c0_i32_0 : i32, i32, i32, i32
  }
  func.func @transform_1(%arg0: i32, %arg1: i32) -> (i32, i32, i32) {
    %c0_i32 = arith.constant 0 : i32
    %c0_i32_0 = arith.constant 0 : i32
    %c0_i32_1 = arith.constant 0 : i32
    return %arg0, %c0_i32, %c0_i32_0 : i32, i32, i32
  }
  func.func @transform_2(%arg0: i32, %arg1: i32) -> (i32, i32, i32) {
    %c0_i32 = arith.constant 0 : i32
    %c0_i32_0 = arith.constant 0 : i32
    %c0_i32_1 = arith.constant 0 : i32
    return %arg0, %c0_i32, %c0_i32_0 : i32, i32, i32
  }
  func.func @transform_3(%arg0: i32, %arg1: i32) -> (i32, i32, i32, i32) {
    %c0_i32 = arith.constant 0 : i32
    %c0_i32_0 = arith.constant 0 : i32
    %c0_i32_1 = arith.constant 0 : i32
    return %arg0, %c0_i32, %arg1, %c0_i32_0 : i32, i32, i32, i32
  }
}

</mosaic_0001>

<llo_original>
// kernel: conv_layer_pallas.3
$region0: #{conv_layer_pallas.3}
  #allocation0 [shape = 'u32[]', space=smem, size = 0x4, offset = 0x4, fixed_abs, tag = 'smem constant byte address 0x4 - core index']
  #allocation1 [shape = 'u32[72,128]{1,0:T(1,128)}', space=vmem, size = 0x9000, scoped, tag = 'internal scratch']
  %s0 = inlined_call_operand.vmem [shape: f32[2,16,16,32], index: 0, kind: input, shape index: {}]
  %s1 = inlined_call_operand.vmem [shape: f32[2,16,1], index: 1, kind: input, shape index: {}]
  %s2 = inlined_call_operand.vmem [shape: f32[2,16,1], index: 2, kind: input, shape index: {}]
  %s3 = inlined_call_operand.hbm [shape: f32[2,16,16,16], index: 3, kind: output, shape index: {}]
  %s4 = sld [smem:[#allocation0]]
  $region83: #{conv_layer_pallas.3} parent=0
    _
  %s6 = ssub.s32 1, %s4
  %s7 = scalar_select 0, %s6, %s4
  $region1: #{conv_layer_pallas.3} parent=0
    #allocation2 [shape = 'u8[131072]{0}', space=vmem, size = 0x20000, scoped, tag = 'input window, operand 0']
    #allocation3 [shape = 'u8[131072]{0}', space=vmem, size = 0x20000, scoped, tag = 'output window, operand 0']
    #allocation4 [shape = 's32[2]{0}', space=sflag, size = 0x8, scoped, tag = 'scoped memory for conv_layer_pallas.3']
    %8 = vsyncpa [#allocation4], 0
    %s9 = scalar_lea.sflag [#allocation4], 1
    %10 = vsyncpa %s9, 0
    loop: start=0, step=1, limit=6
    $region2: #{conv_layer_pallas.3} parent=1 // loop_pre_header
      _
    $region3: #{conv_layer_pallas.3} parent=1 // loop_header
      %s12 = sphi 0, %s16
      %p13 = scmp.ge.s32.totalorder %s12, 6
      %s19 = sphi 0, %s31
      %s20 = sphi 0, %s27
      %s21 = sphi 0, %s19
      %s22 = sphi 0, %s20
      %s23 = sphi 0, %s21
      %s24 = sphi 0, %s22
      %s36 = sphi 0, %s38
      %s39 = sphi 0, %s36
      %s40 = sphi 0, %s39
      %s56 = sphi 0, %s40
      %s62 = sphi 0, %s64
      %s65 = sphi 0, %s62
      %s66 = sphi 0, %s65
      %s82 = sphi 0, %s66
      %s88 = sphi 0, %s90
      %s91 = sphi 0, %s88
      %s92 = sphi 0, %s91
      %s108 = sphi 0, %s92
      %s116 = sphi 0, %s118
      %s119 = sphi 0, %s116
      %s120 = sphi 0, %s119
      %s136 = sphi 0, %s120
    $region4: #{conv_layer_pallas.3} parent=1 // loop_header_branch
      %15 = sbr.rel (%p13) target = $region8
    $region5: #{conv_layer_pallas.3} parent=1 // loop_body
      %s17 = ssub.s32 %s12, 1
      %s18 = ssub.s32 %s12, 2
      %s25 = sadd.s32 1, %s20
      %p26 = scmp.ge.s32.totalorder %s25, 2
      %s27 = scalar_select %p26, 0, %s25
      %s28 = sadd.s32 1, %s19
      %s29 = scalar_select %p26, %s28, %s19
      %p30 = scmp.ge.s32.totalorder %s29, 2
      %s31 = scalar_select %p30, 0, %s29
      %s32 = ssub.s32 %s19, %s31
      %s33 = ssub.s32 %s20, %s27
      %s34 = sor.u32 %s32, %s33
      %p35 = scmp.eq.s32.totalorder %s34, 0
      %s37 = sadd.s32 %s36, 1
      %s38 = scalar_select %p35, %s36, %s37
      %p41 = pneg %p35
      %p42 = scmp.eq.s32.totalorder %s12, 3
      %p43 = por %p41, %p42
      %p44 = scmp.ne.s32.totalorder %s36, %s39
      %p45 = scmp.eq.s32.totalorder %s12, 0
      %p46 = por %p44, %p45
      %p47 = scmp.ne.s32.totalorder %s36, %s39
      %p48 = scmp.eq.s32.totalorder %s17, 3
      %p49 = por %p47, %p48
      %p50 = scmp.ne.s32.totalorder %s39, %s40
      %p51 = scmp.eq.s32.totalorder %s17, 0
      %p52 = por %p50, %p51
      %p53 = scmp.ne.s32.totalorder %s39, %s40
      %p54 = scmp.eq.s32.totalorder %s18, 3
      %p55 = por %p53, %p54
      %p57 = scmp.ne.s32.totalorder %s40, %s56
      %p58 = scmp.eq.s32.totalorder %s18, 0
      %p59 = por %p57, %p58
      %s60 = ssub.s32 %s19, %s31
      %p61 = scmp.eq.s32.totalorder %s60, 0
      %s63 = sadd.s32 %s62, 1
      %s64 = scalar_select %p61, %s62, %s63
      %p67 = pneg %p61
      %p68 = scmp.eq.s32.totalorder %s12, 3
      %p69 = por %p67, %p68
      %p70 = scmp.ne.s32.totalorder %s62, %s65
      %p71 = scmp.eq.s32.totalorder %s12, 0
      %p72 = por %p70, %p71
      %p73 = scmp.ne.s32.totalorder %s62, %s65
      %p74 = scmp.eq.s32.totalorder %s17, 3
      %p75 = por %p73, %p74
      %p76 = scmp.ne.s32.totalorder %s65, %s66
      %p77 = scmp.eq.s32.totalorder %s17, 0
      %p78 = por %p76, %p77
      %p79 = scmp.ne.s32.totalorder %s65, %s66
      %p80 = scmp.eq.s32.totalorder %s18, 3
      %p81 = por %p79, %p80
      %p83 = scmp.ne.s32.totalorder %s66, %s82
      %p84 = scmp.eq.s32.totalorder %s18, 0
      %p85 = por %p83, %p84
      %s86 = ssub.s32 %s19, %s31
      %p87 = scmp.eq.s32.totalorder %s86, 0
      %s89 = sadd.s32 %s88, 1
      %s90 = scalar_select %p87, %s88, %s89
      %p93 = pneg %p87
      %p94 = scmp.eq.s32.totalorder %s12, 3
      %p95 = por %p93, %p94
      %p96 = scmp.ne.s32.totalorder %s88, %s91
      %p97 = scmp.eq.s32.totalorder %s12, 0
      %p98 = por %p96, %p97
      %p99 = scmp.ne.s32.totalorder %s88, %s91
      %p100 = scmp.eq.s32.totalorder %s17, 3
      %p101 = por %p99, %p100
      %p102 = scmp.ne.s32.totalorder %s91, %s92
      %p103 = scmp.eq.s32.totalorder %s17, 0
      %p104 = por %p102, %p103
      %p105 = scmp.ne.s32.totalorder %s91, %s92
      %p106 = scmp.eq.s32.totalorder %s18, 3
      %p107 = por %p105, %p106
      %p109 = scmp.ne.s32.totalorder %s92, %s108
      %p110 = scmp.eq.s32.totalorder %s18, 0
      %p111 = por %p109, %p110
      %s112 = ssub.s32 %s19, %s31
      %s113 = ssub.s32 %s20, %s27
      %s114 = sor.u32 %s112, %s113
      %p115 = scmp.eq.s32.totalorder %s114, 0
      %s117 = sadd.s32 %s116, 1
      %s118 = scalar_select %p115, %s116, %s117
      %p121 = pneg %p115
      %p122 = scmp.eq.s32.totalorder %s12, 3
      %p123 = por %p121, %p122
      %p124 = scmp.ne.s32.totalorder %s116, %s119
      %p125 = scmp.eq.s32.totalorder %s12, 0
      %p126 = por %p124, %p125
      %p127 = scmp.ne.s32.totalorder %s116, %s119
      %p128 = scmp.eq.s32.totalorder %s17, 3
      %p129 = por %p127, %p128
      %p130 = scmp.ne.s32.totalorder %s119, %s120
      %p131 = scmp.eq.s32.totalorder %s17, 0
      %p132 = por %p130, %p131
      %p133 = scmp.ne.s32.totalorder %s119, %s120
      %p134 = scmp.eq.s32.totalorder %s18, 3
      %p135 = por %p133, %p134
      %p137 = scmp.ne.s32.totalorder %s120, %s136
      %p138 = scmp.eq.s32.totalorder %s18, 0
      %p139 = por %p137, %p138
      %p140 = scmp.le.s32.totalorder 1, %s12
      %p141 = scmp.lt.s32.totalorder %s12, 5
      %p142 = pnand %p140, %p141
      %p143 = pneg %p142
      // Predicated region
      $region9: #{conv_layer_pallas.3} parent=5 // pred_check
        _
      $region10: #{conv_layer_pallas.3} parent=5 // pred_check_branch
        %145 = sbr.rel (%p142) target = $region12
      $region11: #{conv_layer_pallas.3} parent=5 // pred_region
        %s146 = ssub.s32 %s12, 1
      $region12: #{conv_layer_pallas.3} parent=5 // pred_fallthru
        _
      %p147 = scmp.lt.s32.totalorder %s12, 4
      // Predicated region
      $region13: #{conv_layer_pallas.3} parent=5 // pred_check
        %p148 = pneg %p147
      $region14: #{conv_layer_pallas.3} parent=5 // pred_check_branch
        %150 = sbr.rel (%p148) target = $region16
      $region15: #{conv_layer_pallas.3} parent=5 // pred_region
        // Predicated region
        $region17: #{conv_layer_pallas.3} parent=15 // pred_check
          %p151 = pneg %p46
        $region18: #{conv_layer_pallas.3} parent=15 // pred_check_branch
          %153 = sbr.rel (%p151) target = $region20
        $region19: #{conv_layer_pallas.3} parent=15 // pred_region
          %s154 = sand.u32 %s36, 1
          %s155 = sand.u32 %s36, 1
          %s156 = smul.addr %s155, 128
          %s157 = scalar_lea.vmem [#allocation2], %s156
          %s158 = smul.addr %s19, 32
          %s159 = sadd.s32 %s20, %s158
          %s160 = smul.addr %s159, 8
          %s161 = scalar_lea.vmem %s0, %s160
          // Predicated region
          $region21: #{conv_layer_pallas.3} parent=19 // pred_check
            _
          $region22: #{conv_layer_pallas.3} parent=19 // pred_check_branch
            %163 = sbr.rel (0) target = $region24
          $region23: #{conv_layer_pallas.3} parent=19 // pred_region
            // Predicated region
            $region25: #{conv_layer_pallas.3} parent=23 // pred_check
              _
            $region26: #{conv_layer_pallas.3} parent=23 // pred_check_branch
              %165 = sbr.rel (0) target = $region28
            $region27: #{conv_layer_pallas.3} parent=23 // pred_region
              // Predicated region
              $region40: #{conv_layer_pallas.3} parent=27 // pred_check
                _
              $region41: #{conv_layer_pallas.3} parent=27 // pred_check_branch
                %211 = sbr.rel (0) target = $region43
              $region42: #{conv_layer_pallas.3} parent=27 // pred_region
                loop: start=0, step=1, limit=1
                $region44: #{conv_layer_pallas.3} parent=42 // loop_pre_header
                  _
                $region45: #{conv_layer_pallas.3} parent=42 // loop_header
                  %s213 = sphi 0, %s217
                  %p214 = scmp.ge.s32.totalorder %s213, 1
                  %s218 = sphi %s161, %s161
                  %s219 = sphi %s157, %s157
                $region46: #{conv_layer_pallas.3} parent=42 // loop_header_branch
                  %216 = sbr.rel (%p214) target = $region50
                $region47: #{conv_layer_pallas.3} parent=42 // loop_body
                  %v220 = vld [vmem:[%s218] sm:$0xff]
                  %221 = vst [vmem:[%s219] sm:$0xff] %v220
                  %v222 = vld [vmem:[%s218 + $0x10] sm:$0xff]
                  %223 = vst [vmem:[%s219 + $0x8] sm:$0xff] %v222
                  %v224 = vld [vmem:[%s218 + $0x20] sm:$0xff]
                  %225 = vst [vmem:[%s219 + $0x10] sm:$0xff] %v224
                  %v226 = vld [vmem:[%s218 + $0x30] sm:$0xff]
                  %227 = vst [vmem:[%s219 + $0x18] sm:$0xff] %v226
                  %v228 = vld [vmem:[%s218 + $0x40] sm:$0xff]
                  %229 = vst [vmem:[%s219 + $0x20] sm:$0xff] %v228
                  %v230 = vld [vmem:[%s218 + $0x50] sm:$0xff]
                  %231 = vst [vmem:[%s219 + $0x28] sm:$0xff] %v230
                  %v232 = vld [vmem:[%s218 + $0x60] sm:$0xff]
                  %233 = vst [vmem:[%s219 + $0x30] sm:$0xff] %v232
                  %v234 = vld [vmem:[%s218 + $0x70] sm:$0xff]
                  %235 = vst [vmem:[%s219 + $0x38] sm:$0xff] %v234
                  %v236 = vld [vmem:[%s218 + $0x80] sm:$0xff]
                  %237 = vst [vmem:[%s219 + $0x40] sm:$0xff] %v236
                  %v238 = vld [vmem:[%s218 + $0x90] sm:$0xff]
                  %239 = vst [vmem:[%s219 + $0x48] sm:$0xff] %v238
                  %v240 = vld [vmem:[%s218 + $0xa0] sm:$0xff]
                  %241 = vst [vmem:[%s219 + $0x50] sm:$0xff] %v240
                  %v242 = vld [vmem:[%s218 + $0xb0] sm:$0xff]
                  %243 = vst [vmem:[%s219 + $0x58] sm:$0xff] %v242
                  %v244 = vld [vmem:[%s218 + $0xc0] sm:$0xff]
                  %245 = vst [vmem:[%s219 + $0x60] sm:$0xff] %v244
                  %v246 = vld [vmem:[%s218 + $0xd0] sm:$0xff]
                  %247 = vst [vmem:[%s219 + $0x68] sm:$0xff] %v246
                  %v248 = vld [vmem:[%s218 + $0xe0] sm:$0xff]
                  %249 = vst [vmem:[%s219 + $0x70] sm:$0xff] %v248
                  %v250 = vld [vmem:[%s218 + $0xf0] sm:$0xff]
                  %251 = vst [vmem:[%s219 + $0x78] sm:$0xff] %v250
                $region48: #{conv_layer_pallas.3} parent=42 // loop_footer
                  %s217 = sadd.s32 1, %s213
                $region49: #{conv_layer_pallas.3} parent=42 // loop_footer_branch
                  %212 = sbr.rel target = $region45
                $region50: #{conv_layer_pallas.3} parent=42 // loop_exit
                  _
              $region43: #{conv_layer_pallas.3} parent=27 // pred_fallthru
                _
              // Predicated region
              $region51: #{conv_layer_pallas.3} parent=27 // pred_check
                _
              $region52: #{conv_layer_pallas.3} parent=27 // pred_check_branch
                %253 = sbr.rel target = $region54
              $region53: #{conv_layer_pallas.3} parent=27 // pred_region
                _
              $region54: #{conv_layer_pallas.3} parent=27 // pred_fallthru
                _
            $region28: #{conv_layer_pallas.3} parent=23 // pred_fallthru
              _
            // Predicated region
            $region29: #{conv_layer_pallas.3} parent=23 // pred_check
              _
            $region30: #{conv_layer_pallas.3} parent=23 // pred_check_branch
              %167 = sbr.rel target = $region32
            $region31: #{conv_layer_pallas.3} parent=23 // pred_region
              %s169 = ssub.s32 256, 1
              loop: start=0, step=1, limit=1
              $region33: #{conv_layer_pallas.3} parent=31 // loop_pre_header
                _
              $region34: #{conv_layer_pallas.3} parent=31 // loop_header
                %s171 = sphi 0, %s175
                %p172 = scmp.ge.s32.totalorder %s171, 1
                %s176 = sphi %s161, %s161
                %s177 = sphi %s157, %s157
              $region35: #{conv_layer_pallas.3} parent=31 // loop_header_branch
                %174 = sbr.rel (%p172) target = $region39
              $region36: #{conv_layer_pallas.3} parent=31 // loop_body
                %v178 = vld [vmem:[%s176] sm:%s169]
                %179 = vst [vmem:[%s177] sm:%s169] %v178
                %v180 = vld [vmem:[%s176 + $0x10] sm:%s169]
                %181 = vst [vmem:[%s177 + $0x8] sm:%s169] %v180
                %v182 = vld [vmem:[%s176 + $0x20] sm:%s169]
                %183 = vst [vmem:[%s177 + $0x10] sm:%s169] %v182
                %v184 = vld [vmem:[%s176 + $0x30] sm:%s169]
                %185 = vst [vmem:[%s177 + $0x18] sm:%s169] %v184
                %v186 = vld [vmem:[%s176 + $0x40] sm:%s169]
                %187 = vst [vmem:[%s177 + $0x20] sm:%s169] %v186
                %v188 = vld [vmem:[%s176 + $0x50] sm:%s169]
                %189 = vst [vmem:[%s177 + $0x28] sm:%s169] %v188
                %v190 = vld [vmem:[%s176 + $0x60] sm:%s169]
                %191 = vst [vmem:[%s177 + $0x30] sm:%s169] %v190
                %v192 = vld [vmem:[%s176 + $0x70] sm:%s169]
                %193 = vst [vmem:[%s177 + $0x38] sm:%s169] %v192
                %v194 = vld [vmem:[%s176 + $0x80] sm:%s169]
                %195 = vst [vmem:[%s177 + $0x40] sm:%s169] %v194
                %v196 = vld [vmem:[%s176 + $0x90] sm:%s169]
                %197 = vst [vmem:[%s177 + $0x48] sm:%s169] %v196
                %v198 = vld [vmem:[%s176 + $0xa0] sm:%s169]
                %199 = vst [vmem:[%s177 + $0x50] sm:%s169] %v198
                %v200 = vld [vmem:[%s176 + $0xb0] sm:%s169]
                %201 = vst [vmem:[%s177 + $0x58] sm:%s169] %v200
                %v202 = vld [vmem:[%s176 + $0xc0] sm:%s169]
                %203 = vst [vmem:[%s177 + $0x60] sm:%s169] %v202
                %v204 = vld [vmem:[%s176 + $0xd0] sm:%s169]
                %205 = vst [vmem:[%s177 + $0x68] sm:%s169] %v204
                %v206 = vld [vmem:[%s176 + $0xe0] sm:%s169]
                %207 = vst [vmem:[%s177 + $0x70] sm:%s169] %v206
                %v208 = vld [vmem:[%s176 + $0xf0] sm:%s169]
                %209 = vst [vmem:[%s177 + $0x78] sm:%s169] %v208
              $region37: #{conv_layer_pallas.3} parent=31 // loop_footer
                %s175 = sadd.s32 1, %s171
              $region38: #{conv_layer_pallas.3} parent=31 // loop_footer_branch
                %170 = sbr.rel target = $region34
              $region39: #{conv_layer_pallas.3} parent=31 // loop_exit
                _
            $region32: #{conv_layer_pallas.3} parent=23 // pred_fallthru
              _
          $region24: #{conv_layer_pallas.3} parent=19 // pred_fallthru
            _
          %254 = vnop
        $region20: #{conv_layer_pallas.3} parent=15 // pred_fallthru
          _
        // Predicated region
        $region55: #{conv_layer_pallas.3} parent=15 // pred_check
          %p255 = pneg %p72
        $region56: #{conv_layer_pallas.3} parent=15 // pred_check_branch
          %257 = sbr.rel (%p255) target = $region58
        $region57: #{conv_layer_pallas.3} parent=15 // pred_region
          %p258 = scmp.lt.s32.totalorder %s19, 1
          %s259 = scalar_select %p258, %s19, 1
          %s260 = smul.addr %s259, 2
          %s261 = smul.addr %s260, 8
          %s262 = scalar_lea.vmem %s1, %s261
        $region58: #{conv_layer_pallas.3} parent=15 // pred_fallthru
          _
        // Predicated region
        $region59: #{conv_layer_pallas.3} parent=15 // pred_check
          %p263 = pneg %p98
        $region60: #{conv_layer_pallas.3} parent=15 // pred_check_branch
          %265 = sbr.rel (%p263) target = $region62
        $region61: #{conv_layer_pallas.3} parent=15 // pred_region
          %p266 = scmp.lt.s32.totalorder %s19, 1
          %s267 = scalar_select %p266, %s19, 1
          %s268 = smul.addr %s267, 2
          %s269 = smul.addr %s268, 8
          %s270 = scalar_lea.vmem %s2, %s269
        $region62: #{conv_layer_pallas.3} parent=15 // pred_fallthru
          _
      $region16: #{conv_layer_pallas.3} parent=5 // pred_fallthru
        _
      %p271 = scmp.le.s32.totalorder 1, %s12
      %p272 = scmp.lt.s32.totalorder %s12, 5
      %p273 = pnand %p271, %p272
      %p274 = pneg %p273
      // Predicated region
      $region63: #{conv_layer_pallas.3} parent=5 // pred_check
        _
      $region64: #{conv_layer_pallas.3} parent=5 // pred_check_branch
        %276 = sbr.rel (%p273) target = $region66
      $region65: #{conv_layer_pallas.3} parent=5 // pred_region
        %s277 = ssub.s32 %s12, 1
        %s278 = sand.u32 %s39, 1
        %s279 = sand.u32 %s39, 1
        %s280 = smul.addr %s279, 128
        %s281 = scalar_lea.vmem [#allocation2], %s280
        // Predicated region
        $region67: #{conv_layer_pallas.3} parent=65 // pred_check
          %p282 = pneg %p52
        $region68: #{conv_layer_pallas.3} parent=65 // pred_check_branch
          %284 = sbr.rel (%p282) target = $region70
        $region69: #{conv_layer_pallas.3} parent=65 // pred_region
          _
        $region70: #{conv_layer_pallas.3} parent=65 // pred_fallthru
          _
        %s285 = sand.u32 %s39, 1
        %s286 = sand.u32 %s39, 1
        %s287 = smul.addr %s286, 128
        %s288 = scalar_lea.vmem [#allocation2], %s287
        %p289 = pneg %p52
        %p290 = pneg %p49
        %p291 = scmp.lt.s32.totalorder %s21, 1
        %s292 = scalar_select %p291, %s21, 1
        %s293 = smul.addr %s292, 2
        %s294 = smul.addr %s293, 8
        %s295 = scalar_lea.vmem %s1, %s294
        %p296 = pneg %p78
        %p297 = pneg %p75
        %p298 = scmp.lt.s32.totalorder %s21, 1
        %s299 = scalar_select %p298, %s21, 1
        %s300 = smul.addr %s299, 2
        %s301 = smul.addr %s300, 8
        %s302 = scalar_lea.vmem %s2, %s301
        %p303 = pneg %p104
        %p304 = pneg %p101
        %p305 = pneg %p132
        %p306 = pneg %p129
        %s307 = sand.u32 %s119, 1
        %s308 = scalar_lea.sflag [#allocation4], %s307
        %s309 = sand.u32 %s119, 1
        %s310 = smul.addr %s309, 128
        %s311 = scalar_lea.vmem [#allocation3], %s310
        %p312 = scmp.lt.s32.totalorder %s21, 1
        %s313 = scalar_select %p312, %s21, 1
        %s314 = smul.addr %s313, 2
        %s315 = smul.addr %s314, 8
        %s316 = scalar_lea.vmem %s1, %s315
        %p317 = scmp.lt.s32.totalorder %s21, 1
        %s318 = scalar_select %p317, %s21, 1
        %s319 = smul.addr %s318, 2
        %s320 = smul.addr %s319, 8
        %s321 = scalar_lea.vmem %s2, %s320
        %v322 = vld [vmem:[%s281] sm:$0xff]
        %v323 = vld [vmem:[%s281 + $0x8] sm:$0xff]
        %v324 = vld [vmem:[%s281 + $0x10] sm:$0xff]
        %v325 = vld [vmem:[%s281 + $0x18] sm:$0xff]
        %v326 = vld [vmem:[%s281 + $0x20] sm:$0xff]
        %v327 = vld [vmem:[%s281 + $0x28] sm:$0xff]
        %v328 = vld [vmem:[%s281 + $0x30] sm:$0xff]
        %v329 = vld [vmem:[%s281 + $0x38] sm:$0xff]
        %v330 = vld [vmem:[%s281 + $0x40] sm:$0xff]
        %v331 = vld [vmem:[%s281 + $0x48] sm:$0xff]
        %v332 = vld [vmem:[%s281 + $0x50] sm:$0xff]
        %v333 = vld [vmem:[%s281 + $0x58] sm:$0xff]
        %v334 = vld [vmem:[%s281 + $0x60] sm:$0xff]
        %v335 = vld [vmem:[%s281 + $0x68] sm:$0xff]
        %v336 = vld [vmem:[%s281 + $0x70] sm:$0xff]
        %v337 = vld [vmem:[%s281 + $0x78] sm:$0xff]
        %v338 = vld [vmem:[%s316] sm:$0xff]
        %v339 = vld [vmem:[%s316 + $0x8] sm:$0xff]
        %v342 = vrot.slane %v338, 1
        %v343 = vrot.slane %v338, 2
        %v344 = vrot.slane %v338, 3
        %v345 = vrot.slane %v338, 4
        %v346 = vrot.slane %v338, 5
        %v347 = vrot.slane %v338, 6
        %v348 = vrot.slane %v338, 7
        %v349 = vrot.slane %v339, 1
        %v350 = vrot.slane %v339, 2
        %v351 = vrot.slane %v339, 3
        %v352 = vrot.slane %v339, 4
        %v353 = vrot.slane %v339, 5
        %v354 = vrot.slane %v339, 6
        %v355 = vrot.slane %v339, 7
        %v356 = vld [vmem:[%s321] sm:$0xff]
        %v357 = vld [vmem:[%s321 + $0x8] sm:$0xff]
        %v360 = vrot.slane %v356, 1
        %v361 = vrot.slane %v356, 2
        %v362 = vrot.slane %v356, 3
        %v363 = vrot.slane %v356, 4
        %v364 = vrot.slane %v356, 5
        %v365 = vrot.slane %v356, 6
        %v366 = vrot.slane %v356, 7
        %v367 = vrot.slane %v357, 1
        %v368 = vrot.slane %v357, 2
        %v369 = vrot.slane %v357, 3
        %v370 = vrot.slane %v357, 4
        %v371 = vrot.slane %v357, 5
        %v372 = vrot.slane %v357, 6
        %v373 = vrot.slane %v357, 7
        %v374 = vperm.slane %v338, 0
        %v375 = vperm.slane %v342, 0
        %v376 = vperm.slane %v343, 0
        %v377 = vperm.slane %v344, 0
        %v378 = vperm.slane %v345, 0
        %v379 = vperm.slane %v346, 0
        %v380 = vperm.slane %v347, 0
        %v381 = vperm.slane %v348, 0
        %v382 = vperm.slane %v339, 0
        %v383 = vperm.slane %v349, 0
        %v384 = vperm.slane %v350, 0
        %v385 = vperm.slane %v351, 0
        %v386 = vperm.slane %v352, 0
        %v387 = vperm.slane %v353, 0
        %v388 = vperm.slane %v354, 0
        %v389 = vperm.slane %v355, 0
        %390 = vset.pattern.permute.xlu0 0
        %391 = vperm.xlu0 %390, %v374
        %v392 = vpop.permute.xlu0 %391
        %394 = vset.pattern.permute.xlu0 0
        %395 = vperm.xlu0 %394, %v375
        %v396 = vpop.permute.xlu0 %395
        %398 = vset.pattern.permute.xlu0 0
        %399 = vperm.xlu0 %398, %v376
        %v400 = vpop.permute.xlu0 %399
        %402 = vset.pattern.permute.xlu0 0
        %403 = vperm.xlu0 %402, %v377
        %v404 = vpop.permute.xlu0 %403
        %406 = vset.pattern.permute.xlu0 0
        %407 = vperm.xlu0 %406, %v378
        %v408 = vpop.permute.xlu0 %407
        %410 = vset.pattern.permute.xlu0 0
        %411 = vperm.xlu0 %410, %v379
        %v412 = vpop.permute.xlu0 %411
        %414 = vset.pattern.permute.xlu0 0
        %415 = vperm.xlu0 %414, %v380
        %v416 = vpop.permute.xlu0 %415
        %418 = vset.pattern.permute.xlu0 0
        %419 = vperm.xlu0 %418, %v381
        %v420 = vpop.permute.xlu0 %419
        %422 = vset.pattern.permute.xlu0 0
        %423 = vperm.xlu0 %422, %v382
        %v424 = vpop.permute.xlu0 %423
        %426 = vset.pattern.permute.xlu0 0
        %427 = vperm.xlu0 %426, %v383
        %v428 = vpop.permute.xlu0 %427
        %430 = vset.pattern.permute.xlu0 0
        %431 = vperm.xlu0 %430, %v384
        %v432 = vpop.permute.xlu0 %431
        %434 = vset.pattern.permute.xlu0 0
        %435 = vperm.xlu0 %434, %v385
        %v436 = vpop.permute.xlu0 %435
        %438 = vset.pattern.permute.xlu0 0
        %439 = vperm.xlu0 %438, %v386
        %v440 = vpop.permute.xlu0 %439
        %442 = vset.pattern.permute.xlu0 0
        %443 = vperm.xlu0 %442, %v387
        %v444 = vpop.permute.xlu0 %443
        %446 = vset.pattern.permute.xlu0 0
        %447 = vperm.xlu0 %446, %v388
        %v448 = vpop.permute.xlu0 %447
        %450 = vset.pattern.permute.xlu0 0
        %451 = vperm.xlu0 %450, %v389
        %v452 = vpop.permute.xlu0 %451
        %v454 = vsub.f32 %v322, %v392
        %v455 = vsub.f32 %v323, %v396
        %v456 = vsub.f32 %v324, %v400
        %v457 = vsub.f32 %v325, %v404
        %v458 = vsub.f32 %v326, %v408
        %v459 = vsub.f32 %v327, %v412
        %v460 = vsub.f32 %v328, %v416
        %v461 = vsub.f32 %v329, %v420
        %v462 = vsub.f32 %v330, %v424
        %v463 = vsub.f32 %v331, %v428
        %v464 = vsub.f32 %v332, %v432
        %v465 = vsub.f32 %v333, %v436
        %v466 = vsub.f32 %v334, %v440
        %v467 = vsub.f32 %v335, %v444
        %v468 = vsub.f32 %v336, %v448
        %v469 = vsub.f32 %v337, %v452
        %v470 = vperm.slane %v356, 0
        %v471 = vperm.slane %v360, 0
        %v472 = vperm.slane %v361, 0
        %v473 = vperm.slane %v362, 0
        %v474 = vperm.slane %v363, 0
        %v475 = vperm.slane %v364, 0
        %v476 = vperm.slane %v365, 0
        %v477 = vperm.slane %v366, 0
        %v478 = vperm.slane %v357, 0
        %v479 = vperm.slane %v367, 0
        %v480 = vperm.slane %v368, 0
        %v481 = vperm.slane %v369, 0
        %v482 = vperm.slane %v370, 0
        %v483 = vperm.slane %v371, 0
        %v484 = vperm.slane %v372, 0
        %v485 = vperm.slane %v373, 0
        %486 = vset.pattern.permute.xlu0 0
        %487 = vperm.xlu0 %486, %v470
        %v488 = vpop.permute.xlu0 %487
        %490 = vset.pattern.permute.xlu0 0
        %491 = vperm.xlu0 %490, %v471
        %v492 = vpop.permute.xlu0 %491
        %494 = vset.pattern.permute.xlu0 0
        %495 = vperm.xlu0 %494, %v472
        %v496 = vpop.permute.xlu0 %495
        %498 = vset.pattern.permute.xlu0 0
        %499 = vperm.xlu0 %498, %v473
        %v500 = vpop.permute.xlu0 %499
        %502 = vset.pattern.permute.xlu0 0
        %503 = vperm.xlu0 %502, %v474
        %v504 = vpop.permute.xlu0 %503
        %506 = vset.pattern.permute.xlu0 0
        %507 = vperm.xlu0 %506, %v475
        %v508 = vpop.permute.xlu0 %507
        %510 = vset.pattern.permute.xlu0 0
        %511 = vperm.xlu0 %510, %v476
        %v512 = vpop.permute.xlu0 %511
        %514 = vset.pattern.permute.xlu0 0
        %515 = vperm.xlu0 %514, %v477
        %v516 = vpop.permute.xlu0 %515
        %518 = vset.pattern.permute.xlu0 0
        %519 = vperm.xlu0 %518, %v478
        %v520 = vpop.permute.xlu0 %519
        %522 = vset.pattern.permute.xlu0 0
        %523 = vperm.xlu0 %522, %v479
        %v524 = vpop.permute.xlu0 %523
        %526 = vset.pattern.permute.xlu0 0
        %527 = vperm.xlu0 %526, %v480
        %v528 = vpop.permute.xlu0 %527
        %530 = vset.pattern.permute.xlu0 0
        %531 = vperm.xlu0 %530, %v481
        %v532 = vpop.permute.xlu0 %531
        %534 = vset.pattern.permute.xlu0 0
        %535 = vperm.xlu0 %534, %v482
        %v536 = vpop.permute.xlu0 %535
        %538 = vset.pattern.permute.xlu0 0
        %539 = vperm.xlu0 %538, %v483
        %v540 = vpop.permute.xlu0 %539
        %542 = vset.pattern.permute.xlu0 0
        %543 = vperm.xlu0 %542, %v484
        %v544 = vpop.permute.xlu0 %543
        %546 = vset.pattern.permute.xlu0 0
        %547 = vperm.xlu0 %546, %v485
        %v548 = vpop.permute.xlu0 %547
        %v550 = vmul.f32 %v454, %v488
        %v551 = vmul.f32 %v455, %v492
        %v552 = vmul.f32 %v456, %v496
        %v553 = vmul.f32 %v457, %v500
        %v554 = vmul.f32 %v458, %v504
        %v555 = vmul.f32 %v459, %v508
        %v556 = vmul.f32 %v460, %v512
        %v557 = vmul.f32 %v461, %v516
        %v558 = vmul.f32 %v462, %v520
        %v559 = vmul.f32 %v463, %v524
        %v560 = vmul.f32 %v464, %v528
        %v561 = vmul.f32 %v465, %v532
        %v562 = vmul.f32 %v466, %v536
        %v563 = vmul.f32 %v467, %v540
        %v564 = vmul.f32 %v468, %v544
        %v565 = vmul.f32 %v469, %v548
        %vm566 = vcmask 130048
        %567 = vst.msk [vmem:[%s311] sm:$0xff] %vm566, %v550
        %568 = vst.msk [vmem:[%s311 + $0x8] sm:$0xff] %vm566, %v551
        %569 = vst.msk [vmem:[%s311 + $0x10] sm:$0xff] %vm566, %v552
        %570 = vst.msk [vmem:[%s311 + $0x18] sm:$0xff] %vm566, %v553
        %571 = vst.msk [vmem:[%s311 + $0x20] sm:$0xff] %vm566, %v554
        %572 = vst.msk [vmem:[%s311 + $0x28] sm:$0xff] %vm566, %v555
        %573 = vst.msk [vmem:[%s311 + $0x30] sm:$0xff] %vm566, %v556
        %574 = vst.msk [vmem:[%s311 + $0x38] sm:$0xff] %vm566, %v557
        %575 = vst.msk [vmem:[%s311 + $0x40] sm:$0xff] %vm566, %v558
        %576 = vst.msk [vmem:[%s311 + $0x48] sm:$0xff] %vm566, %v559
        %577 = vst.msk [vmem:[%s311 + $0x50] sm:$0xff] %vm566, %v560
        %578 = vst.msk [vmem:[%s311 + $0x58] sm:$0xff] %vm566, %v561
        %579 = vst.msk [vmem:[%s311 + $0x60] sm:$0xff] %vm566, %v562
        %580 = vst.msk [vmem:[%s311 + $0x68] sm:$0xff] %vm566, %v563
        %581 = vst.msk [vmem:[%s311 + $0x70] sm:$0xff] %vm566, %v564
        %582 = vst.msk [vmem:[%s311 + $0x78] sm:$0xff] %vm566, %v565
        %s583 = sand.u32 %s119, 1
        %s584 = scalar_lea.sflag [#allocation4], %s583
        %s585 = sand.u32 %s119, 1
        %s586 = smul.addr %s585, 128
        %s587 = scalar_lea.vmem [#allocation3], %s586
        // Predicated region
        $region71: #{conv_layer_pallas.3} parent=65 // pred_check
          %p588 = pneg %p129
        $region72: #{conv_layer_pallas.3} parent=65 // pred_check_branch
          %590 = sbr.rel (%p588) target = $region74
        $region73: #{conv_layer_pallas.3} parent=65 // pred_region
          %592 = vsyncadd %s584, 0
          %s593 = smul.addr %s21, 32
          %s594 = sadd.s32 %s22, %s593
          %s595 = smul.addr %s594, 8
          %s596 = scalar_lea.hbm %s3, %s595
          %s597 = sshll.u32 %s587, 4
          %s598 = int_to_ptr.vmem [resolvable:$true] %s597
          %s599 = sshll.u32 %s596, 4
          %s600 = int_to_ptr.hbm [resolvable:$true] %s599
          %605 = dma.vmem_to_hbm [thread:$0]  %s598, 2048, %s600, %s584, 128, 256, 8
        $region74: #{conv_layer_pallas.3} parent=65 // pred_fallthru
          _
      $region66: #{conv_layer_pallas.3} parent=5 // pred_fallthru
        _
      %p606 = scmp.le.s32.totalorder 2, %s12
      // Predicated region
      $region75: #{conv_layer_pallas.3} parent=5 // pred_check
        %p607 = pneg %p606
      $region76: #{conv_layer_pallas.3} parent=5 // pred_check_branch
        %609 = sbr.rel (%p607) target = $region78
      $region77: #{conv_layer_pallas.3} parent=5 // pred_region
        %s610 = ssub.s32 %s12, 2
        // Predicated region
        $region79: #{conv_layer_pallas.3} parent=77 // pred_check
          %p611 = pneg %p135
        $region80: #{conv_layer_pallas.3} parent=77 // pred_check_branch
          %613 = sbr.rel (%p611) target = $region82
        $region81: #{conv_layer_pallas.3} parent=77 // pred_region
          %s614 = sand.u32 %s120, 1
          %s615 = scalar_lea.sflag [#allocation4], %s614
          %s616 = sand.u32 %s120, 1
          %s617 = smul.addr %s616, 128
          %s618 = scalar_lea.vmem [#allocation3], %s617
          %620 = dma.done %s615, 2048
        $region82: #{conv_layer_pallas.3} parent=77 // pred_fallthru
          _
      $region78: #{conv_layer_pallas.3} parent=5 // pred_fallthru
        _
    $region6: #{conv_layer_pallas.3} parent=1 // loop_footer
      %s16 = sadd.s32 1, %s12
    $region7: #{conv_layer_pallas.3} parent=1 // loop_footer_branch
      %11 = sbr.rel target = $region3
    $region8: #{conv_layer_pallas.3} parent=1 // loop_exit
      _
    %621 = vsyncpa [#allocation4], 1
    %s622 = scalar_lea.sflag [#allocation4], 1
    %623 = vsyncpa %s622, 1

// kernel: conv_layer_pallas.2
$region0: #{conv_layer_pallas.2}
  #allocation0 [shape = 'u32[]', space=smem, size = 0x4, offset = 0x4, fixed_abs, tag = 'smem constant byte address 0x4 - core index']
  #allocation1 [shape = 'u32[72,128]{1,0:T(1,128)}', space=vmem, size = 0x9000, scoped, tag = 'internal scratch']
  #allocation2 [shape = 'f32[8,1]{1,0:T(8,128)}', space=vmem, size = 0x1000, scoped, tag = 'scratch operand']
  #allocation3 [shape = 'f32[8,1]{1,0:T(8,128)}', space=vmem, size = 0x1000, scoped, tag = 'scratch operand']
  %s0 = inlined_call_operand.vmem [shape: f32[2,4,1,1,608], index: 0, kind: input, shape index: {}]
  %s1 = inlined_call_operand.vmem [shape: f32[2,2,4,1,1,96], index: 1, kind: input, shape index: {}]
  %s2 = inlined_call_operand.vmem [shape: f32[9,16,4], index: 2, kind: input, shape index: {}]
  %s3 = inlined_call_operand.vmem [shape: f32[2,16,512], index: 3, kind: output, shape index: {0}]
  %s4 = inlined_call_operand.vmem [shape: f32[2,16,1], index: 4, kind: output, shape index: {1}]
  %s5 = inlined_call_operand.vmem [shape: f32[2,16,1], index: 5, kind: output, shape index: {2}]
  %6 = xla_tuple %s3, %s4, %s5
  %s7 = sld [smem:[#allocation0]]
  $region173: #{conv_layer_pallas.2} parent=0
    _
  %s9 = ssub.s32 1, %s7
  %s10 = scalar_select 0, %s9, %s7
  $region1: #{conv_layer_pallas.2} parent=0
    #allocation4 [shape = 'u8[8192]{0}', space=vmem, size = 0x2000, scoped, tag = 'input window, operand 0']
    #allocation5 [shape = 'u8[73728]{0}', space=vmem, size = 0x12000, scoped, tag = 'input window, operand 2']
    loop: start=0, step=1, limit=10
    $region2: #{conv_layer_pallas.2} parent=1 // loop_pre_header
      _
    $region3: #{conv_layer_pallas.2} parent=1 // loop_header
      %s12 = sphi 0, %s16
      %p13 = scmp.ge.s32.totalorder %s12, 10
      %s19 = sphi 0, %s38
      %s20 = sphi 0, %s34
      %s21 = sphi 0, %s30
      %s22 = sphi 0, %s19
      %s23 = sphi 0, %s20
      %s24 = sphi 0, %s21
      %s25 = sphi 0, %s22
      %s26 = sphi 0, %s23
      %s27 = sphi 0, %s24
      %s43 = sphi 0, %s45
      %s46 = sphi 0, %s43
      %s47 = sphi 0, %s46
      %s63 = sphi 0, %s47
      %s71 = sphi 0, %s73
      %s74 = sphi 0, %s71
      %s75 = sphi 0, %s74
      %s91 = sphi 0, %s75
      %s97 = sphi 0, %s99
      %s100 = sphi 0, %s97
      %s101 = sphi 0, %s100
      %s117 = sphi 0, %s101
      %s127 = sphi 0, %s129
      %s130 = sphi 0, %s127
      %s131 = sphi 0, %s130
      %s147 = sphi 0, %s131
      %s155 = sphi 0, %s157
      %s158 = sphi 0, %s155
      %s159 = sphi 0, %s158
      %s175 = sphi 0, %s159
      %s183 = sphi 0, %s185
      %s186 = sphi 0, %s183
      %s187 = sphi 0, %s186
      %s203 = sphi 0, %s187
    $region4: #{conv_layer_pallas.2} parent=1 // loop_header_branch
      %15 = sbr.rel (%p13) target = $region8
    $region5: #{conv_layer_pallas.2} parent=1 // loop_body
      %s17 = ssub.s32 %s12, 1
      %s18 = ssub.s32 %s12, 2
      %s28 = sadd.s32 1, %s21
      %p29 = scmp.ge.s32.totalorder %s28, 2
      %s30 = scalar_select %p29, 0, %s28
      %s31 = sadd.s32 1, %s20
      %s32 = scalar_select %p29, %s31, %s20
      %p33 = scmp.ge.s32.totalorder %s32, 2
      %s34 = scalar_select %p33, 0, %s32
      %s35 = sadd.s32 1, %s19
      %s36 = scalar_select %p33, %s35, %s19
      %p37 = scmp.ge.s32.totalorder %s36, 2
      %s38 = scalar_select %p37, 0, %s36
      %s39 = ssub.s32 %s19, %s38
      %s40 = ssub.s32 %s21, %s30
      %s41 = sor.u32 %s39, %s40
      %p42 = scmp.eq.s32.totalorder %s41, 0
      %s44 = sadd.s32 %s43, 1
      %s45 = scalar_select %p42, %s43, %s44
      %p48 = pneg %p42
      %p49 = scmp.eq.s32.totalorder %s12, 7
      %p50 = por %p48, %p49
      %p51 = scmp.ne.s32.totalorder %s43, %s46
      %p52 = scmp.eq.s32.totalorder %s12, 0
      %p53 = por %p51, %p52
      %p54 = scmp.ne.s32.totalorder %s43, %s46
      %p55 = scmp.eq.s32.totalorder %s17, 7
      %p56 = por %p54, %p55
      %p57 = scmp.ne.s32.totalorder %s46, %s47
      %p58 = scmp.eq.s32.totalorder %s17, 0
      %p59 = por %p57, %p58
      %p60 = scmp.ne.s32.totalorder %s46, %s47
      %p61 = scmp.eq.s32.totalorder %s18, 7
      %p62 = por %p60, %p61
      %p64 = scmp.ne.s32.totalorder %s47, %s63
      %p65 = scmp.eq.s32.totalorder %s18, 0
      %p66 = por %p64, %p65
      %s67 = ssub.s32 %s19, %s38
      %s68 = ssub.s32 %s21, %s30
      %s69 = sor.u32 %s67, %s68
      %p70 = scmp.eq.s32.totalorder %s69, 0
      %s72 = sadd.s32 %s71, 1
      %s73 = scalar_select %p70, %s71, %s72
      %p76 = pneg %p70
      %p77 = scmp.eq.s32.totalorder %s12, 7
      %p78 = por %p76, %p77
      %p79 = scmp.ne.s32.totalorder %s71, %s74
      %p80 = scmp.eq.s32.totalorder %s12, 0
      %p81 = por %p79, %p80
      %p82 = scmp.ne.s32.totalorder %s71, %s74
      %p83 = scmp.eq.s32.totalorder %s17, 7
      %p84 = por %p82, %p83
      %p85 = scmp.ne.s32.totalorder %s74, %s75
      %p86 = scmp.eq.s32.totalorder %s17, 0
      %p87 = por %p85, %p86
      %p88 = scmp.ne.s32.totalorder %s74, %s75
      %p89 = scmp.eq.s32.totalorder %s18, 7
      %p90 = por %p88, %p89
      %p92 = scmp.ne.s32.totalorder %s75, %s91
      %p93 = scmp.eq.s32.totalorder %s18, 0
      %p94 = por %p92, %p93
      %s95 = ssub.s32 %s20, %s34
      %p96 = scmp.eq.s32.totalorder %s95, 0
      %s98 = sadd.s32 %s97, 1
      %s99 = scalar_select %p96, %s97, %s98
      %p102 = pneg %p96
      %p103 = scmp.eq.s32.totalorder %s12, 7
      %p104 = por %p102, %p103
      %p105 = scmp.ne.s32.totalorder %s97, %s100
      %p106 = scmp.eq.s32.totalorder %s12, 0
      %p107 = por %p105, %p106
      %p108 = scmp.ne.s32.totalorder %s97, %s100
      %p109 = scmp.eq.s32.totalorder %s17, 7
      %p110 = por %p108, %p109
      %p111 = scmp.ne.s32.totalorder %s100, %s101
      %p112 = scmp.eq.s32.totalorder %s17, 0
      %p113 = por %p111, %p112
      %p114 = scmp.ne.s32.totalorder %s100, %s101
      %p115 = scmp.eq.s32.totalorder %s18, 7
      %p116 = por %p114, %p115
      %p118 = scmp.ne.s32.totalorder %s101, %s117
      %p119 = scmp.eq.s32.totalorder %s18, 0
      %p120 = por %p118, %p119
      %s121 = ssub.s32 %s19, %s38
      %s122 = ssub.s32 %s20, %s34
      %s123 = sor.u32 %s121, %s122
      %s124 = ssub.s32 %s21, %s30
      %s125 = sor.u32 %s123, %s124
      %p126 = scmp.eq.s32.totalorder %s125, 0
      %s128 = sadd.s32 %s127, 1
      %s129 = scalar_select %p126, %s127, %s128
      %p132 = pneg %p126
      %p133 = scmp.eq.s32.totalorder %s12, 7
      %p134 = por %p132, %p133
      %p135 = scmp.ne.s32.totalorder %s127, %s130
      %p136 = scmp.eq.s32.totalorder %s12, 0
      %p137 = por %p135, %p136
      %p138 = scmp.ne.s32.totalorder %s127, %s130
      %p139 = scmp.eq.s32.totalorder %s17, 7
      %p140 = por %p138, %p139
      %p141 = scmp.ne.s32.totalorder %s130, %s131
      %p142 = scmp.eq.s32.totalorder %s17, 0
      %p143 = por %p141, %p142
      %p144 = scmp.ne.s32.totalorder %s130, %s131
      %p145 = scmp.eq.s32.totalorder %s18, 7
      %p146 = por %p144, %p145
      %p148 = scmp.ne.s32.totalorder %s131, %s147
      %p149 = scmp.eq.s32.totalorder %s18, 0
      %p150 = por %p148, %p149
      %s151 = ssub.s32 %s19, %s38
      %s152 = ssub.s32 %s20, %s34
      %s153 = sor.u32 %s151, %s152
      %p154 = scmp.eq.s32.totalorder %s153, 0
      %s156 = sadd.s32 %s155, 1
      %s157 = scalar_select %p154, %s155, %s156
      %p160 = pneg %p154
      %p161 = scmp.eq.s32.totalorder %s12, 7
      %p162 = por %p160, %p161
      %p163 = scmp.ne.s32.totalorder %s155, %s158
      %p164 = scmp.eq.s32.totalorder %s12, 0
      %p165 = por %p163, %p164
      %p166 = scmp.ne.s32.totalorder %s155, %s158
      %p167 = scmp.eq.s32.totalorder %s17, 7
      %p168 = por %p166, %p167
      %p169 = scmp.ne.s32.totalorder %s158, %s159
      %p170 = scmp.eq.s32.totalorder %s17, 0
      %p171 = por %p169, %p170
      %p172 = scmp.ne.s32.totalorder %s158, %s159
      %p173 = scmp.eq.s32.totalorder %s18, 7
      %p174 = por %p172, %p173
      %p176 = scmp.ne.s32.totalorder %s159, %s175
      %p177 = scmp.eq.s32.totalorder %s18, 0
      %p178 = por %p176, %p177
      %s179 = ssub.s32 %s19, %s38
      %s180 = ssub.s32 %s20, %s34
      %s181 = sor.u32 %s179, %s180
      %p182 = scmp.eq.s32.totalorder %s181, 0
      %s184 = sadd.s32 %s183, 1
      %s185 = scalar_select %p182, %s183, %s184
      %p188 = pneg %p182
      %p189 = scmp.eq.s32.totalorder %s12, 7
      %p190 = por %p188, %p189
      %p191 = scmp.ne.s32.totalorder %s183, %s186
      %p192 = scmp.eq.s32.totalorder %s12, 0
      %p193 = por %p191, %p192
      %p194 = scmp.ne.s32.totalorder %s183, %s186
      %p195 = scmp.eq.s32.totalorder %s17, 7
      %p196 = por %p194, %p195
      %p197 = scmp.ne.s32.totalorder %s186, %s187
      %p198 = scmp.eq.s32.totalorder %s17, 0
      %p199 = por %p197, %p198
      %p200 = scmp.ne.s32.totalorder %s186, %s187
      %p201 = scmp.eq.s32.totalorder %s18, 7
      %p202 = por %p200, %p201
      %p204 = scmp.ne.s32.totalorder %s187, %s203
      %p205 = scmp.eq.s32.totalorder %s18, 0
      %p206 = por %p204, %p205
      %p207 = scmp.le.s32.totalorder 1, %s12
      %p208 = scmp.lt.s32.totalorder %s12, 9
      %p209 = pnand %p207, %p208
      %p210 = pneg %p209
      // Predicated region
      $region9: #{conv_layer_pallas.2} parent=5 // pred_check
        _
      $region10: #{conv_layer_pallas.2} parent=5 // pred_check_branch
        %212 = sbr.rel (%p209) target = $region12
      $region11: #{conv_layer_pallas.2} parent=5 // pred_region
        %s213 = ssub.s32 %s12, 1
      $region12: #{conv_layer_pallas.2} parent=5 // pred_fallthru
        _
      %p214 = scmp.lt.s32.totalorder %s12, 8
      // Predicated region
      $region13: #{conv_layer_pallas.2} parent=5 // pred_check
        %p215 = pneg %p214
      $region14: #{conv_layer_pallas.2} parent=5 // pred_check_branch
        %217 = sbr.rel (%p215) target = $region16
      $region15: #{conv_layer_pallas.2} parent=5 // pred_region
        // Predicated region
        $region17: #{conv_layer_pallas.2} parent=15 // pred_check
          %p218 = pneg %p53
        $region18: #{conv_layer_pallas.2} parent=15 // pred_check_branch
          %220 = sbr.rel (%p218) target = $region20
        $region19: #{conv_layer_pallas.2} parent=15 // pred_region
          %s221 = sand.u32 %s43, 1
          %s222 = sand.u32 %s43, 1
          %s223 = smul.addr %s222, 8
          %s224 = scalar_lea.vmem [#allocation4], %s223
          %s225 = smul.u32 2, %s21
          %s226 = ssub.s32 5, %s225
          %p227 = scmp.lt.s32.totalorder %s226, 2
          %s228 = scalar_select %p227, %s226, 2
          %s229 = smul.u32 4, %s228
          %p230 = scmp.ne.s32.totalorder 0, %s229
          %s231 = smul.addr %s19, 20
          %s232 = sadd.s32 %s225, %s231
          %s233 = scalar_lea.vmem %s0, %s232
          // Predicated region
          $region21: #{conv_layer_pallas.2} parent=19 // pred_check
            %p234 = pneg %p230
          $region22: #{conv_layer_pallas.2} parent=19 // pred_check_branch
            %236 = sbr.rel (%p234) target = $region24
          $region23: #{conv_layer_pallas.2} parent=19 // pred_region
            %p237 = scmp.lt.u32.totalorder %s228, 8
            %p238 = pneg %p237
            // Predicated region
            $region25: #{conv_layer_pallas.2} parent=23 // pred_check
              _
            $region26: #{conv_layer_pallas.2} parent=23 // pred_check_branch
              %240 = sbr.rel (%p237) target = $region28
            $region27: #{conv_layer_pallas.2} parent=23 // pred_region
              %s262 = sand.u32 %s228, 7
              %p263 = scmp.eq.s32.totalorder %s262, 0
              // Predicated region
              $region40: #{conv_layer_pallas.2} parent=27 // pred_check
                %p264 = pneg %p263
              $region41: #{conv_layer_pallas.2} parent=27 // pred_check_branch
                %266 = sbr.rel (%p264) target = $region43
              $region42: #{conv_layer_pallas.2} parent=27 // pred_region
                %s267 = sshrl.u32 %s228, 3
                %s268 = sshrl.u32 %s267, 3
                // While loop
                $region44: #{conv_layer_pallas.2} parent=42 // loop_pre_header
                  _
                $region45: #{conv_layer_pallas.2} parent=42 // loop_header
                  %s270 = sphi 0, %s272
                  %p271 = scmp.ge.s32.totalorder %s270, %s268
                  %s275 = sphi 0, %s344
                  %s276 = sphi %s233, %s347
                  %s277 = sphi %s224, %s348
                $region46: #{conv_layer_pallas.2} parent=42 // loop_header_branch
                  %274 = sbr.rel (%p271) target = $region50
                $region47: #{conv_layer_pallas.2} parent=42 // loop_body
                  %v278 = vld [vmem:[%s276] sm:$0xff]
                  %279 = vst [vmem:[%s277] sm:$0xff] %v278
                  %v280 = vld [vmem:[%s276 + $0x8] sm:$0xff]
                  %281 = vst [vmem:[%s277 + $0x8] sm:$0xff] %v280
                  %v282 = vld [vmem:[%s276 + $0x10] sm:$0xff]
                  %283 = vst [vmem:[%s277 + $0x10] sm:$0xff] %v282
                  %v284 = vld [vmem:[%s276 + $0x18] sm:$0xff]
                  %285 = vst [vmem:[%s277 + $0x18] sm:$0xff] %v284
                  %v286 = vld [vmem:[%s276 + $0x20] sm:$0xff]
                  %287 = vst [vmem:[%s277 + $0x20] sm:$0xff] %v286
                  %v288 = vld [vmem:[%s276 + $0x28] sm:$0xff]
                  %289 = vst [vmem:[%s277 + $0x28] sm:$0xff] %v288
                  %v290 = vld [vmem:[%s276 + $0x30] sm:$0xff]
                  %291 = vst [vmem:[%s277 + $0x30] sm:$0xff] %v290
                  %v292 = vld [vmem:[%s276 + $0x38] sm:$0xff]
                  %293 = vst [vmem:[%s277 + $0x38] sm:$0xff] %v292
                  %v294 = vld [vmem:[%s276 + $0x5] sm:$0xff]
                  %295 = vst [vmem:[%s277 + $0x2] sm:$0xff] %v294
                  %v296 = vld [vmem:[%s276 + $0xd] sm:$0xff]
                  %297 = vst [vmem:[%s277 + $0xa] sm:$0xff] %v296
                  %v298 = vld [vmem:[%s276 + $0x15] sm:$0xff]
                  %299 = vst [vmem:[%s277 + $0x12] sm:$0xff] %v298
                  %v300 = vld [vmem:[%s276 + $0x1d] sm:$0xff]
                  %301 = vst [vmem:[%s277 + $0x1a] sm:$0xff] %v300
                  %v302 = vld [vmem:[%s276 + $0x25] sm:$0xff]
                  %303 = vst [vmem:[%s277 + $0x22] sm:$0xff] %v302
                  %v304 = vld [vmem:[%s276 + $0x2d] sm:$0xff]
                  %305 = vst [vmem:[%s277 + $0x2a] sm:$0xff] %v304
                  %v306 = vld [vmem:[%s276 + $0x35] sm:$0xff]
                  %307 = vst [vmem:[%s277 + $0x32] sm:$0xff] %v306
                  %v308 = vld [vmem:[%s276 + $0x3d] sm:$0xff]
                  %309 = vst [vmem:[%s277 + $0x3a] sm:$0xff] %v308
                  %v310 = vld [vmem:[%s276 + $0xa] sm:$0xff]
                  %311 = vst [vmem:[%s277 + $0x4] sm:$0xff] %v310
                  %v312 = vld [vmem:[%s276 + $0x12] sm:$0xff]
                  %313 = vst [vmem:[%s277 + $0xc] sm:$0xff] %v312
                  %v314 = vld [vmem:[%s276 + $0x1a] sm:$0xff]
                  %315 = vst [vmem:[%s277 + $0x14] sm:$0xff] %v314
                  %v316 = vld [vmem:[%s276 + $0x22] sm:$0xff]
                  %317 = vst [vmem:[%s277 + $0x1c] sm:$0xff] %v316
                  %v318 = vld [vmem:[%s276 + $0x2a] sm:$0xff]
                  %319 = vst [vmem:[%s277 + $0x24] sm:$0xff] %v318
                  %v320 = vld [vmem:[%s276 + $0x32] sm:$0xff]
                  %321 = vst [vmem:[%s277 + $0x2c] sm:$0xff] %v320
                  %v322 = vld [vmem:[%s276 + $0x3a] sm:$0xff]
                  %323 = vst [vmem:[%s277 + $0x34] sm:$0xff] %v322
                  %v324 = vld [vmem:[%s276 + $0x42] sm:$0xff]
                  %325 = vst [vmem:[%s277 + $0x3c] sm:$0xff] %v324
                  %v326 = vld [vmem:[%s276 + $0xf] sm:$0xff]
                  %327 = vst [vmem:[%s277 + $0x6] sm:$0xff] %v326
                  %v328 = vld [vmem:[%s276 + $0x17] sm:$0xff]
                  %329 = vst [vmem:[%s277 + $0xe] sm:$0xff] %v328
                  %v330 = vld [vmem:[%s276 + $0x1f] sm:$0xff]
                  %331 = vst [vmem:[%s277 + $0x16] sm:$0xff] %v330
                  %v332 = vld [vmem:[%s276 + $0x27] sm:$0xff]
                  %333 = vst [vmem:[%s277 + $0x1e] sm:$0xff] %v332
                  %v334 = vld [vmem:[%s276 + $0x2f] sm:$0xff]
                  %335 = vst [vmem:[%s277 + $0x26] sm:$0xff] %v334
                  %v336 = vld [vmem:[%s276 + $0x37] sm:$0xff]
                  %337 = vst [vmem:[%s277 + $0x2e] sm:$0xff] %v336
                  %v338 = vld [vmem:[%s276 + $0x3f] sm:$0xff]
                  %339 = vst [vmem:[%s277 + $0x36] sm:$0xff] %v338
                  %v340 = vld [vmem:[%s276 + $0x47] sm:$0xff]
                  %341 = vst [vmem:[%s277 + $0x3e] sm:$0xff] %v340
                  %s342 = sadd.s32 1, %s275
                  %p343 = scmp.ge.s32.totalorder %s342, %s268
                  %s344 = scalar_select %p343, 0, %s342
                  %s345 = smul.u32 %s344, 64
                  %s346 = smul.u32 %s344, 64
                  %s347 = scalar_lea.vmem %s233, %s345
                  %s348 = scalar_lea.vmem %s224, %s346 [#allocation4]
                $region48: #{conv_layer_pallas.2} parent=42 // loop_footer
                  %s272 = sadd.s32 %s270, 1
                $region49: #{conv_layer_pallas.2} parent=42 // loop_footer_branch
                  %269 = sbr.rel target = $region45
                $region50: #{conv_layer_pallas.2} parent=42 // loop_exit
                  _
                %s349 = sshrl.u32 %s267, 3
                %s350 = sand.u32 %s267, 7
                %s351 = smul.u32 %s349, 8
                %s352 = smul.u32 8, %s351
                %s353 = scalar_lea.vmem %s233, %s352
                %s354 = smul.u32 8, %s351
                %s355 = scalar_lea.vmem %s224, %s354 [#allocation4]
                // While loop
                $region51: #{conv_layer_pallas.2} parent=42 // loop_pre_header
                  _
                $region52: #{conv_layer_pallas.2} parent=42 // loop_header
                  %s357 = sphi 0, %s359
                  %p358 = scmp.ge.s32.totalorder %s357, %s350
                  %s362 = sphi 0, %s375
                  %s363 = sphi %s353, %s378
                  %s364 = sphi %s355, %s379
                $region53: #{conv_layer_pallas.2} parent=42 // loop_header_branch
                  %361 = sbr.rel (%p358) target = $region57
                $region54: #{conv_layer_pallas.2} parent=42 // loop_body
                  %v365 = vld [vmem:[%s363] sm:$0xff]
                  %366 = vst [vmem:[%s364] sm:$0xff] %v365
                  %v367 = vld [vmem:[%s363 + $0x5] sm:$0xff]
                  %368 = vst [vmem:[%s364 + $0x2] sm:$0xff] %v367
                  %v369 = vld [vmem:[%s363 + $0xa] sm:$0xff]
                  %370 = vst [vmem:[%s364 + $0x4] sm:$0xff] %v369
                  %v371 = vld [vmem:[%s363 + $0xf] sm:$0xff]
                  %372 = vst [vmem:[%s364 + $0x6] sm:$0xff] %v371
                  %s373 = sadd.s32 1, %s362
                  %p374 = scmp.ge.s32.totalorder %s373, %s350
                  %s375 = scalar_select %p374, 0, %s373
                  %s376 = smul.u32 %s375, 8
                  %s377 = smul.u32 %s375, 8
                  %s378 = scalar_lea.vmem %s353, %s376
                  %s379 = scalar_lea.vmem %s355, %s377 [#allocation4]
                $region55: #{conv_layer_pallas.2} parent=42 // loop_footer
                  %s359 = sadd.s32 %s357, 1
                $region56: #{conv_layer_pallas.2} parent=42 // loop_footer_branch
                  %356 = sbr.rel target = $region52
                $region57: #{conv_layer_pallas.2} parent=42 // loop_exit
                  _
              $region43: #{conv_layer_pallas.2} parent=27 // pred_fallthru
                _
              %p380 = pneg %p263
              // Predicated region
              $region58: #{conv_layer_pallas.2} parent=27 // pred_check
                _
              $region59: #{conv_layer_pallas.2} parent=27 // pred_check_branch
                %382 = sbr.rel (%p263) target = $region61
              $region60: #{conv_layer_pallas.2} parent=27 // pred_region
                %s383 = sand.u32 %s228, 7
                %s384 = ssub.s32 %s228, %s383
                %s385 = scalar_lea.vmem %s233, %s384
                %s386 = ssub.s32 %s228, %s383
                %s387 = scalar_lea.vmem %s224, %s386 [#allocation4]
                %s388 = sshrl.u32 %s228, 3
                %s389 = sshrl.u32 %s388, 3
                // While loop
                $region62: #{conv_layer_pallas.2} parent=60 // loop_pre_header
                  _
                $region63: #{conv_layer_pallas.2} parent=60 // loop_header
                  %s391 = sphi 0, %s393
                  %p392 = scmp.ge.s32.totalorder %s391, %s389
                  %s396 = sphi 0, %s465
                  %s397 = sphi %s233, %s468
                  %s398 = sphi %s224, %s469
                $region64: #{conv_layer_pallas.2} parent=60 // loop_header_branch
                  %395 = sbr.rel (%p392) target = $region68
                $region65: #{conv_layer_pallas.2} parent=60 // loop_body
                  %v399 = vld [vmem:[%s397] sm:$0xff]
                  %400 = vst [vmem:[%s398] sm:$0xff] %v399
                  %v401 = vld [vmem:[%s397 + $0x8] sm:$0xff]
                  %402 = vst [vmem:[%s398 + $0x8] sm:$0xff] %v401
                  %v403 = vld [vmem:[%s397 + $0x10] sm:$0xff]
                  %404 = vst [vmem:[%s398 + $0x10] sm:$0xff] %v403
                  %v405 = vld [vmem:[%s397 + $0x18] sm:$0xff]
                  %406 = vst [vmem:[%s398 + $0x18] sm:$0xff] %v405
                  %v407 = vld [vmem:[%s397 + $0x20] sm:$0xff]
                  %408 = vst [vmem:[%s398 + $0x20] sm:$0xff] %v407
                  %v409 = vld [vmem:[%s397 + $0x28] sm:$0xff]
                  %410 = vst [vmem:[%s398 + $0x28] sm:$0xff] %v409
                  %v411 = vld [vmem:[%s397 + $0x30] sm:$0xff]
                  %412 = vst [vmem:[%s398 + $0x30] sm:$0xff] %v411
                  %v413 = vld [vmem:[%s397 + $0x38] sm:$0xff]
                  %414 = vst [vmem:[%s398 + $0x38] sm:$0xff] %v413
                  %v415 = vld [vmem:[%s397 + $0x5] sm:$0xff]
                  %416 = vst [vmem:[%s398 + $0x2] sm:$0xff] %v415
                  %v417 = vld [vmem:[%s397 + $0xd] sm:$0xff]
                  %418 = vst [vmem:[%s398 + $0xa] sm:$0xff] %v417
                  %v419 = vld [vmem:[%s397 + $0x15] sm:$0xff]
                  %420 = vst [vmem:[%s398 + $0x12] sm:$0xff] %v419
                  %v421 = vld [vmem:[%s397 + $0x1d] sm:$0xff]
                  %422 = vst [vmem:[%s398 + $0x1a] sm:$0xff] %v421
                  %v423 = vld [vmem:[%s397 + $0x25] sm:$0xff]
                  %424 = vst [vmem:[%s398 + $0x22] sm:$0xff] %v423
                  %v425 = vld [vmem:[%s397 + $0x2d] sm:$0xff]
                  %426 = vst [vmem:[%s398 + $0x2a] sm:$0xff] %v425
                  %v427 = vld [vmem:[%s397 + $0x35] sm:$0xff]
                  %428 = vst [vmem:[%s398 + $0x32] sm:$0xff] %v427
                  %v429 = vld [vmem:[%s397 + $0x3d] sm:$0xff]
                  %430 = vst [vmem:[%s398 + $0x3a] sm:$0xff] %v429
                  %v431 = vld [vmem:[%s397 + $0xa] sm:$0xff]
                  %432 = vst [vmem:[%s398 + $0x4] sm:$0xff] %v431
                  %v433 = vld [vmem:[%s397 + $0x12] sm:$0xff]
                  %434 = vst [vmem:[%s398 + $0xc] sm:$0xff] %v433
                  %v435 = vld [vmem:[%s397 + $0x1a] sm:$0xff]
                  %436 = vst [vmem:[%s398 + $0x14] sm:$0xff] %v435
                  %v437 = vld [vmem:[%s397 + $0x22] sm:$0xff]
                  %438 = vst [vmem:[%s398 + $0x1c] sm:$0xff] %v437
                  %v439 = vld [vmem:[%s397 + $0x2a] sm:$0xff]
                  %440 = vst [vmem:[%s398 + $0x24] sm:$0xff] %v439
                  %v441 = vld [vmem:[%s397 + $0x32] sm:$0xff]
                  %442 = vst [vmem:[%s398 + $0x2c] sm:$0xff] %v441
                  %v443 = vld [vmem:[%s397 + $0x3a] sm:$0xff]
                  %444 = vst [vmem:[%s398 + $0x34] sm:$0xff] %v443
                  %v445 = vld [vmem:[%s397 + $0x42] sm:$0xff]
                  %446 = vst [vmem:[%s398 + $0x3c] sm:$0xff] %v445
                  %v447 = vld [vmem:[%s397 + $0xf] sm:$0xff]
                  %448 = vst [vmem:[%s398 + $0x6] sm:$0xff] %v447
                  %v449 = vld [vmem:[%s397 + $0x17] sm:$0xff]
                  %450 = vst [vmem:[%s398 + $0xe] sm:$0xff] %v449
                  %v451 = vld [vmem:[%s397 + $0x1f] sm:$0xff]
                  %452 = vst [vmem:[%s398 + $0x16] sm:$0xff] %v451
                  %v453 = vld [vmem:[%s397 + $0x27] sm:$0xff]
                  %454 = vst [vmem:[%s398 + $0x1e] sm:$0xff] %v453
                  %v455 = vld [vmem:[%s397 + $0x2f] sm:$0xff]
                  %456 = vst [vmem:[%s398 + $0x26] sm:$0xff] %v455
                  %v457 = vld [vmem:[%s397 + $0x37] sm:$0xff]
                  %458 = vst [vmem:[%s398 + $0x2e] sm:$0xff] %v457
                  %v459 = vld [vmem:[%s397 + $0x3f] sm:$0xff]
                  %460 = vst [vmem:[%s398 + $0x36] sm:$0xff] %v459
                  %v461 = vld [vmem:[%s397 + $0x47] sm:$0xff]
                  %462 = vst [vmem:[%s398 + $0x3e] sm:$0xff] %v461
                  %s463 = sadd.s32 1, %s396
                  %p464 = scmp.ge.s32.totalorder %s463, %s389
                  %s465 = scalar_select %p464, 0, %s463
                  %s466 = smul.u32 %s465, 64
                  %s467 = smul.u32 %s465, 64
                  %s468 = scalar_lea.vmem %s233, %s466
                  %s469 = scalar_lea.vmem %s224, %s467 [#allocation4]
                $region66: #{conv_layer_pallas.2} parent=60 // loop_footer
                  %s393 = sadd.s32 %s391, 1
                $region67: #{conv_layer_pallas.2} parent=60 // loop_footer_branch
                  %390 = sbr.rel target = $region63
                $region68: #{conv_layer_pallas.2} parent=60 // loop_exit
                  _
                %s470 = sshrl.u32 %s388, 3
                %s471 = sand.u32 %s388, 7
                %s472 = smul.u32 %s470, 8
                %s473 = smul.u32 8, %s472
                %s474 = scalar_lea.vmem %s233, %s473
                %s475 = smul.u32 8, %s472
                %s476 = scalar_lea.vmem %s224, %s475 [#allocation4]
                // While loop
                $region69: #{conv_layer_pallas.2} parent=60 // loop_pre_header
                  _
                $region70: #{conv_layer_pallas.2} parent=60 // loop_header
                  %s478 = sphi 0, %s480
                  %p479 = scmp.ge.s32.totalorder %s478, %s471
                  %s483 = sphi 0, %s496
                  %s484 = sphi %s474, %s499
                  %s485 = sphi %s476, %s500
                $region71: #{conv_layer_pallas.2} parent=60 // loop_header_branch
                  %482 = sbr.rel (%p479) target = $region75
                $region72: #{conv_layer_pallas.2} parent=60 // loop_body
                  %v486 = vld [vmem:[%s484] sm:$0xff]
                  %487 = vst [vmem:[%s485] sm:$0xff] %v486
                  %v488 = vld [vmem:[%s484 + $0x5] sm:$0xff]
                  %489 = vst [vmem:[%s485 + $0x2] sm:$0xff] %v488
                  %v490 = vld [vmem:[%s484 + $0xa] sm:$0xff]
                  %491 = vst [vmem:[%s485 + $0x4] sm:$0xff] %v490
                  %v492 = vld [vmem:[%s484 + $0xf] sm:$0xff]
                  %493 = vst [vmem:[%s485 + $0x6] sm:$0xff] %v492
                  %s494 = sadd.s32 1, %s483
                  %p495 = scmp.ge.s32.totalorder %s494, %s471
                  %s496 = scalar_select %p495, 0, %s494
                  %s497 = smul.u32 %s496, 8
                  %s498 = smul.u32 %s496, 8
                  %s499 = scalar_lea.vmem %s474, %s497
                  %s500 = scalar_lea.vmem %s476, %s498 [#allocation4]
                $region73: #{conv_layer_pallas.2} parent=60 // loop_footer
                  %s480 = sadd.s32 %s478, 1
                $region74: #{conv_layer_pallas.2} parent=60 // loop_footer_branch
                  %477 = sbr.rel target = $region70
                $region75: #{conv_layer_pallas.2} parent=60 // loop_exit
                  _
                %s501 = sshll.u32 1, %s383
                %s502 = ssub.s32 %s501, 1
                loop: start=0, step=1, limit=1
                $region76: #{conv_layer_pallas.2} parent=60 // loop_pre_header
                  _
                $region77: #{conv_layer_pallas.2} parent=60 // loop_header
                  %s504 = sphi 0, %s508
                  %p505 = scmp.ge.s32.totalorder %s504, 1
                  %s509 = sphi %s385, %s385
                  %s510 = sphi %s387, %s387
                $region78: #{conv_layer_pallas.2} parent=60 // loop_header_branch
                  %507 = sbr.rel (%p505) target = $region82
                $region79: #{conv_layer_pallas.2} parent=60 // loop_body
                  %v511 = vld [vmem:[%s509] sm:%s502]
                  %512 = vst [vmem:[%s510] sm:%s502] %v511
                  %v513 = vld [vmem:[%s509 + $0x5] sm:%s502]
                  %514 = vst [vmem:[%s510 + $0x2] sm:%s502] %v513
                  %v515 = vld [vmem:[%s509 + $0xa] sm:%s502]
                  %516 = vst [vmem:[%s510 + $0x4] sm:%s502] %v515
                  %v517 = vld [vmem:[%s509 + $0xf] sm:%s502]
                  %518 = vst [vmem:[%s510 + $0x6] sm:%s502] %v517
                $region80: #{conv_layer_pallas.2} parent=60 // loop_footer
                  %s508 = sadd.s32 1, %s504
                $region81: #{conv_layer_pallas.2} parent=60 // loop_footer_branch
                  %503 = sbr.rel target = $region77
                $region82: #{conv_layer_pallas.2} parent=60 // loop_exit
                  _
              $region61: #{conv_layer_pallas.2} parent=27 // pred_fallthru
                _
            $region28: #{conv_layer_pallas.2} parent=23 // pred_fallthru
              _
            // Predicated region
            $region29: #{conv_layer_pallas.2} parent=23 // pred_check
              %p241 = pneg %p237
            $region30: #{conv_layer_pallas.2} parent=23 // pred_check_branch
              %243 = sbr.rel (%p241) target = $region32
            $region31: #{conv_layer_pallas.2} parent=23 // pred_region
              %s244 = sshll.u32 1, %s228
              %s245 = ssub.s32 %s244, 1
              loop: start=0, step=1, limit=1
              $region33: #{conv_layer_pallas.2} parent=31 // loop_pre_header
                _
              $region34: #{conv_layer_pallas.2} parent=31 // loop_header
                %s247 = sphi 0, %s251
                %p248 = scmp.ge.s32.totalorder %s247, 1
                %s252 = sphi %s233, %s233
                %s253 = sphi %s224, %s224
              $region35: #{conv_layer_pallas.2} parent=31 // loop_header_branch
                %250 = sbr.rel (%p248) target = $region39
              $region36: #{conv_layer_pallas.2} parent=31 // loop_body
                %v254 = vld [vmem:[%s252] sm:%s245]
                %255 = vst [vmem:[%s253] sm:%s245] %v254
                %v256 = vld [vmem:[%s252 + $0x5] sm:%s245]
                %257 = vst [vmem:[%s253 + $0x2] sm:%s245] %v256
                %v258 = vld [vmem:[%s252 + $0xa] sm:%s245]
                %259 = vst [vmem:[%s253 + $0x4] sm:%s245] %v258
                %v260 = vld [vmem:[%s252 + $0xf] sm:%s245]
                %261 = vst [vmem:[%s253 + $0x6] sm:%s245] %v260
              $region37: #{conv_layer_pallas.2} parent=31 // loop_footer
                %s251 = sadd.s32 1, %s247
              $region38: #{conv_layer_pallas.2} parent=31 // loop_footer_branch
                %246 = sbr.rel target = $region34
              $region39: #{conv_layer_pallas.2} parent=31 // loop_exit
                _
            $region32: #{conv_layer_pallas.2} parent=23 // pred_fallthru
              _
          $region24: #{conv_layer_pallas.2} parent=19 // pred_fallthru
            _
          %519 = vnop
        $region20: #{conv_layer_pallas.2} parent=15 // pred_fallthru
          _
        // Predicated region
        $region83: #{conv_layer_pallas.2} parent=15 // pred_check
          %p520 = pneg %p81
        $region84: #{conv_layer_pallas.2} parent=15 // pred_check_branch
          %522 = sbr.rel (%p520) target = $region86
        $region85: #{conv_layer_pallas.2} parent=15 // pred_region
          %p523 = scmp.lt.s32.totalorder %s19, 1
          %s524 = scalar_select %p523, %s19, 1
          %p525 = scmp.lt.s32.totalorder %s21, 1
          %s526 = scalar_select %p525, %s21, 1
          %s527 = smul.addr %s526, 4
          %s528 = smul.addr %s524, 8
          %s529 = sadd.s32 %s527, %s528
          %s530 = scalar_lea.vmem %s1, %s529
        $region86: #{conv_layer_pallas.2} parent=15 // pred_fallthru
          _
        // Predicated region
        $region87: #{conv_layer_pallas.2} parent=15 // pred_check
          %p531 = pneg %p107
        $region88: #{conv_layer_pallas.2} parent=15 // pred_check_branch
          %533 = sbr.rel (%p531) target = $region90
        $region89: #{conv_layer_pallas.2} parent=15 // pred_region
          %s534 = sand.u32 %s97, 1
          %s535 = sand.u32 %s97, 1
          %s536 = smul.addr %s535, 72
          %s537 = scalar_lea.vmem [#allocation5], %s536
          %s538 = smul.addr %s20, 8
          %s539 = scalar_lea.vmem %s2, %s538
          // Predicated region
          $region91: #{conv_layer_pallas.2} parent=89 // pred_check
            _
          $region92: #{conv_layer_pallas.2} parent=89 // pred_check_branch
            %541 = sbr.rel (0) target = $region94
          $region93: #{conv_layer_pallas.2} parent=89 // pred_region
            // Predicated region
            $region95: #{conv_layer_pallas.2} parent=93 // pred_check
              _
            $region96: #{conv_layer_pallas.2} parent=93 // pred_check_branch
              %543 = sbr.rel (0) target = $region98
            $region97: #{conv_layer_pallas.2} parent=93 // pred_region
              // Predicated region
              $region110: #{conv_layer_pallas.2} parent=97 // pred_check
                _
              $region111: #{conv_layer_pallas.2} parent=97 // pred_check_branch
                %575 = sbr.rel (0) target = $region113
              $region112: #{conv_layer_pallas.2} parent=97 // pred_region
                loop: start=0, step=1, limit=1
                $region114: #{conv_layer_pallas.2} parent=112 // loop_pre_header
                  _
                $region115: #{conv_layer_pallas.2} parent=112 // loop_header
                  %s577 = sphi 0, %s581
                  %p578 = scmp.ge.s32.totalorder %s577, 1
                  %s582 = sphi %s539, %s539
                  %s583 = sphi %s537, %s537
                $region116: #{conv_layer_pallas.2} parent=112 // loop_header_branch
                  %580 = sbr.rel (%p578) target = $region120
                $region117: #{conv_layer_pallas.2} parent=112 // loop_body
                  %v584 = vld [vmem:[%s582] sm:$0xff]
                  %585 = vst [vmem:[%s583] sm:$0xff] %v584
                  %v586 = vld [vmem:[%s582 + $0x10] sm:$0xff]
                  %587 = vst [vmem:[%s583 + $0x8] sm:$0xff] %v586
                  %v588 = vld [vmem:[%s582 + $0x20] sm:$0xff]
                  %589 = vst [vmem:[%s583 + $0x10] sm:$0xff] %v588
                  %v590 = vld [vmem:[%s582 + $0x30] sm:$0xff]
                  %591 = vst [vmem:[%s583 + $0x18] sm:$0xff] %v590
                  %v592 = vld [vmem:[%s582 + $0x40] sm:$0xff]
                  %593 = vst [vmem:[%s583 + $0x20] sm:$0xff] %v592
                  %v594 = vld [vmem:[%s582 + $0x50] sm:$0xff]
                  %595 = vst [vmem:[%s583 + $0x28] sm:$0xff] %v594
                  %v596 = vld [vmem:[%s582 + $0x60] sm:$0xff]
                  %597 = vst [vmem:[%s583 + $0x30] sm:$0xff] %v596
                  %v598 = vld [vmem:[%s582 + $0x70] sm:$0xff]
                  %599 = vst [vmem:[%s583 + $0x38] sm:$0xff] %v598
                  %v600 = vld [vmem:[%s582 + $0x80] sm:$0xff]
                  %601 = vst [vmem:[%s583 + $0x40] sm:$0xff] %v600
                $region118: #{conv_layer_pallas.2} parent=112 // loop_footer
                  %s581 = sadd.s32 1, %s577
                $region119: #{conv_layer_pallas.2} parent=112 // loop_footer_branch
                  %576 = sbr.rel target = $region115
                $region120: #{conv_layer_pallas.2} parent=112 // loop_exit
                  _
              $region113: #{conv_layer_pallas.2} parent=97 // pred_fallthru
                _
              // Predicated region
              $region121: #{conv_layer_pallas.2} parent=97 // pred_check
                _
              $region122: #{conv_layer_pallas.2} parent=97 // pred_check_branch
                %603 = sbr.rel target = $region124
              $region123: #{conv_layer_pallas.2} parent=97 // pred_region
                _
              $region124: #{conv_layer_pallas.2} parent=97 // pred_fallthru
                _
            $region98: #{conv_layer_pallas.2} parent=93 // pred_fallthru
              _
            // Predicated region
            $region99: #{conv_layer_pallas.2} parent=93 // pred_check
              _
            $region100: #{conv_layer_pallas.2} parent=93 // pred_check_branch
              %545 = sbr.rel target = $region102
            $region101: #{conv_layer_pallas.2} parent=93 // pred_region
              %s547 = ssub.s32 256, 1
              loop: start=0, step=1, limit=1
              $region103: #{conv_layer_pallas.2} parent=101 // loop_pre_header
                _
              $region104: #{conv_layer_pallas.2} parent=101 // loop_header
                %s549 = sphi 0, %s553
                %p550 = scmp.ge.s32.totalorder %s549, 1
                %s554 = sphi %s539, %s539
                %s555 = sphi %s537, %s537
              $region105: #{conv_layer_pallas.2} parent=101 // loop_header_branch
                %552 = sbr.rel (%p550) target = $region109
              $region106: #{conv_layer_pallas.2} parent=101 // loop_body
                %v556 = vld [vmem:[%s554] sm:%s547]
                %557 = vst [vmem:[%s555] sm:%s547] %v556
                %v558 = vld [vmem:[%s554 + $0x10] sm:%s547]
                %559 = vst [vmem:[%s555 + $0x8] sm:%s547] %v558
                %v560 = vld [vmem:[%s554 + $0x20] sm:%s547]
                %561 = vst [vmem:[%s555 + $0x10] sm:%s547] %v560
                %v562 = vld [vmem:[%s554 + $0x30] sm:%s547]
                %563 = vst [vmem:[%s555 + $0x18] sm:%s547] %v562
                %v564 = vld [vmem:[%s554 + $0x40] sm:%s547]
                %565 = vst [vmem:[%s555 + $0x20] sm:%s547] %v564
                %v566 = vld [vmem:[%s554 + $0x50] sm:%s547]
                %567 = vst [vmem:[%s555 + $0x28] sm:%s547] %v566
                %v568 = vld [vmem:[%s554 + $0x60] sm:%s547]
                %569 = vst [vmem:[%s555 + $0x30] sm:%s547] %v568
                %v570 = vld [vmem:[%s554 + $0x70] sm:%s547]
                %571 = vst [vmem:[%s555 + $0x38] sm:%s547] %v570
                %v572 = vld [vmem:[%s554 + $0x80] sm:%s547]
                %573 = vst [vmem:[%s555 + $0x40] sm:%s547] %v572
              $region107: #{conv_layer_pallas.2} parent=101 // loop_footer
                %s553 = sadd.s32 1, %s549
              $region108: #{conv_layer_pallas.2} parent=101 // loop_footer_branch
                %548 = sbr.rel target = $region104
              $region109: #{conv_layer_pallas.2} parent=101 // loop_exit
                _
            $region102: #{conv_layer_pallas.2} parent=93 // pred_fallthru
              _
          $region94: #{conv_layer_pallas.2} parent=89 // pred_fallthru
            _
          %604 = vnop
        $region90: #{conv_layer_pallas.2} parent=15 // pred_fallthru
          _
      $region16: #{conv_layer_pallas.2} parent=5 // pred_fallthru
        _
      %p605 = scmp.le.s32.totalorder 1, %s12
      %p606 = scmp.lt.s32.totalorder %s12, 9
      %p607 = pnand %p605, %p606
      %p608 = pneg %p607
      // Predicated region
      $region125: #{conv_layer_pallas.2} parent=5 // pred_check
        _
      $region126: #{conv_layer_pallas.2} parent=5 // pred_check_branch
        %610 = sbr.rel (%p607) target = $region128
      $region127: #{conv_layer_pallas.2} parent=5 // pred_region
        %s611 = ssub.s32 %s12, 1
        %s612 = sand.u32 %s46, 1
        %s613 = sand.u32 %s46, 1
        %s614 = smul.addr %s613, 8
        %s615 = scalar_lea.vmem [#allocation4], %s614
        // Predicated region
        $region129: #{conv_layer_pallas.2} parent=127 // pred_check
          %p616 = pneg %p59
        $region130: #{conv_layer_pallas.2} parent=127 // pred_check_branch
          %618 = sbr.rel (%p616) target = $region132
        $region131: #{conv_layer_pallas.2} parent=127 // pred_region
          _
        $region132: #{conv_layer_pallas.2} parent=127 // pred_fallthru
          _
        %s619 = sand.u32 %s100, 1
        %s620 = sand.u32 %s100, 1
        %s621 = smul.addr %s620, 72
        %s622 = scalar_lea.vmem [#allocation5], %s621
        // Predicated region
        $region133: #{conv_layer_pallas.2} parent=127 // pred_check
          %p623 = pneg %p113
        $region134: #{conv_layer_pallas.2} parent=127 // pred_check_branch
          %625 = sbr.rel (%p623) target = $region136
        $region135: #{conv_layer_pallas.2} parent=127 // pred_region
          _
        $region136: #{conv_layer_pallas.2} parent=127 // pred_fallthru
          _
        %s626 = sand.u32 %s46, 1
        %s627 = sand.u32 %s46, 1
        %s628 = smul.addr %s627, 8
        %s629 = scalar_lea.vmem [#allocation4], %s628
        %p630 = pneg %p59
        %p631 = pneg %p56
        %p632 = scmp.lt.s32.totalorder %s22, 1
        %s633 = scalar_select %p632, %s22, 1
        %p634 = scmp.lt.s32.totalorder %s24, 1
        %s635 = scalar_select %p634, %s24, 1
        %s636 = smul.addr %s635, 4
        %s637 = smul.addr %s633, 8
        %s638 = sadd.s32 %s636, %s637
        %s639 = scalar_lea.vmem %s1, %s638
        %p640 = pneg %p87
        %p641 = pneg %p84
        %s642 = sand.u32 %s100, 1
        %s643 = sand.u32 %s100, 1
        %s644 = smul.addr %s643, 72
        %s645 = scalar_lea.vmem [#allocation5], %s644
        %p646 = pneg %p113
        %p647 = pneg %p110
        %p648 = pneg %p143
        %p649 = pneg %p140
        %s650 = smul.u32 2, %s24
        %p651 = scmp.lt.s32.totalorder %s22, 1
        %s652 = scalar_select %p651, %s22, 1
        %p653 = scmp.lt.s32.totalorder %s23, 1
        %s654 = scalar_select %p653, %s23, 1
        %p655 = scmp.lt.s32.totalorder %s650, 3
        %s656 = scalar_select %p655, %s650, 3
        %s657 = smul.addr %s654, 4
        %s658 = sadd.s32 %s656, %s657
        %s659 = smul.addr %s652, 8
        %s660 = sadd.s32 %s658, %s659
        %s661 = smul.addr %s660, 8
        %s662 = scalar_lea.vmem %s3, %s661
        %p663 = pneg %p171
        %p664 = pneg %p168
        %p665 = scmp.lt.s32.totalorder %s22, 1
        %s666 = scalar_select %p665, %s22, 1
        %p667 = scmp.lt.s32.totalorder %s23, 1
        %s668 = scalar_select %p667, %s23, 1
        %s669 = smul.addr %s666, 2
        %s670 = sadd.s32 %s668, %s669
        %s671 = smul.addr %s670, 8
        %s672 = scalar_lea.vmem %s4, %s671
        %p673 = pneg %p199
        %p674 = pneg %p196
        %p675 = scmp.lt.s32.totalorder %s22, 1
        %s676 = scalar_select %p675, %s22, 1
        %p677 = scmp.lt.s32.totalorder %s23, 1
        %s678 = scalar_select %p677, %s23, 1
        %s679 = smul.addr %s676, 2
        %s680 = sadd.s32 %s678, %s679
        %s681 = smul.addr %s680, 8
        %s682 = scalar_lea.vmem %s5, %s681
        %s683 = smul.u32 2, %s24
        %s684 = ssub.s32 5, %s683
        %p685 = scmp.lt.s32.totalorder %s684, 2
        %s686 = scalar_select %p685, %s684, 2
        %s687 = smul.u32 4, %s686
        %p688 = scmp.lt.s32.totalorder %s22, 1
        %s689 = scalar_select %p688, %s22, 1
        %p690 = scmp.lt.s32.totalorder %s24, 1
        %s691 = scalar_select %p690, %s24, 1
        %s692 = smul.addr %s691, 4
        %s693 = smul.addr %s689, 8
        %s694 = sadd.s32 %s692, %s693
        %s695 = scalar_lea.vmem %s1, %s694
        %s696 = smul.u32 2, %s24
        %p697 = scmp.lt.s32.totalorder %s22, 1
        %s698 = scalar_select %p697, %s22, 1
        %p699 = scmp.lt.s32.totalorder %s23, 1
        %s700 = scalar_select %p699, %s23, 1
        %p701 = scmp.lt.s32.totalorder %s696, 3
        %s702 = scalar_select %p701, %s696, 3
        %s703 = smul.addr %s700, 4
        %s704 = sadd.s32 %s702, %s703
        %s705 = smul.addr %s698, 8
        %s706 = sadd.s32 %s704, %s705
        %s707 = smul.addr %s706, 8
        %s708 = scalar_lea.vmem %s3, %s707
        %s709 = smul.u32 2, %s24
        %p710 = scmp.lt.s32.totalorder %s22, 1
        %s711 = scalar_select %p710, %s22, 1
        %p712 = scmp.lt.s32.totalorder %s23, 1
        %s713 = scalar_select %p712, %s23, 1
        %s714 = smul.addr %s711, 2
        %s715 = sadd.s32 %s713, %s714
        %s716 = smul.addr %s715, 8
        %s717 = scalar_lea.vmem %s4, %s716
        %p718 = scmp.lt.s32.totalorder %s22, 1
        %s719 = scalar_select %p718, %s22, 1
        %p720 = scmp.lt.s32.totalorder %s23, 1
        %s721 = scalar_select %p720, %s23, 1
        %s722 = smul.addr %s719, 2
        %s723 = sadd.s32 %s721, %s722
        %s724 = smul.addr %s723, 8
        %s725 = scalar_lea.vmem %s5, %s724
        %p726 = scmp.eq.s32.totalorder %s24, 0
        // Predicated region
        $region137: #{conv_layer_pallas.2} parent=127 // pred_check
          %p727 = pneg %p726
        $region138: #{conv_layer_pallas.2} parent=127 // pred_check_branch
          %729 = sbr.rel (%p727) target = $region140
        $region139: #{conv_layer_pallas.2} parent=127 // pred_region
          %vm730 = vcmask 7168
          %731 = vst.msk [vmem:[#allocation2] sm:$0xff] %vm730, 0.0
          %732 = vst.msk [vmem:[#allocation3] sm:$0xff] %vm730, 0.0
        $region140: #{conv_layer_pallas.2} parent=127 // pred_fallthru
          _
        %v733 = vld [vmem:[%s615] sm:$0x3]
        %v734 = vld [vmem:[%s615 + $0x2] sm:$0x3]
        %v735 = vld [vmem:[%s615 + $0x4] sm:$0x3]
        %v736 = vld [vmem:[%s615 + $0x6] sm:$0x3]
        %v737 = vld [vmem:[%s695] sm:$0x1]
        %v738 = vld [vmem:[%s695 + $0x1] sm:$0x1]
        %v739 = vld [vmem:[%s695 + $0x2] sm:$0x1]
        %v740 = vld [vmem:[%s695 + $0x3] sm:$0x1]
        %745 = vst [vmem:[#allocation1] ss:$9 sm:$0xff] %v733
        %s746 = scalar_lea.vmem [#allocation1], 1
        %747 = vst [vmem:[%s746] ss:$9 sm:$0xff] %v734
        %s748 = scalar_lea.vmem [#allocation1], 2
        %749 = vst [vmem:[%s748] ss:$9 sm:$0xff] %v735
        %s750 = scalar_lea.vmem [#allocation1], 3
        %751 = vst [vmem:[%s750] ss:$9 sm:$0xff] %v736
        %v752 = vld [vmem:[#allocation1] sm:$0xff]
        %v753 = vld [vmem:[#allocation1 + $0x9] sm:$0xff]
        %758 = vst [vmem:[#allocation1] ss:$9 sm:$0xff] %v737
        %s759 = scalar_lea.vmem [#allocation1], 1
        %760 = vst [vmem:[%s759] ss:$9 sm:$0xff] %v738
        %s761 = scalar_lea.vmem [#allocation1], 2
        %762 = vst [vmem:[%s761] ss:$9 sm:$0xff] %v739
        %s763 = scalar_lea.vmem [#allocation1], 3
        %764 = vst [vmem:[%s763] ss:$9 sm:$0xff] %v740
        %v765 = vld [vmem:[#allocation1] sm:$0xff]
        %v766 = vld [vmem:[%s622] sm:$0xff]
        %s767 = scalar_lea.vmem %s622, 8 [#allocation5]
        %v768 = vld [vmem:[%s767] sm:$0xff]
        %769 = vrot.lane.b32.xlu0 %v752, 127
        %v770 = vpop.permute.xlu0 %769
        %771 = vrot.lane.b32.xlu0 %v753, 127
        %v772 = vpop.permute.xlu0 %771
        %773 = vrot.lane.b32.xlu0 %v765, 127
        %v774 = vpop.permute.xlu0 %773
        %vm775 = vcmask 1039360
        %v776 = vsel %vm775, %v770, %v772
        %v777 = vsel %vm775, %v772, %v774
        %vm778 = vcmask 31744
        %v780 = vsel %vm778, %v768, 0
        %vm782 = vcmask 1043456
        %v783 = vsel %vm782, %v776, 0
        %v785 = vsel %vm782, %v777, 0
        %787 = vmatpush.msra.mxu0 0.0
        %788 = vmatpush.msra.mxu0 0.0
        %789 = vmatpush.msra.mxu0 0.0
        %790 = vmatpush.msra.mxu0 0.0
        %791 = vmatpush.msra.mxu0 0.0
        %792 = vmatpush.msra.mxu0 0.0
        %793 = vmatpush.msra.mxu0 0.0
        %794 = vmatpush.msra.mxu0 0.0
        %795 = vmatpush.msra.mxu0 0.0
        %796 = vmatpush.msra.mxu0 0.0
        %797 = vmatpush.msra.mxu0 0.0
        %798 = vmatpush.msra.mxu0 0.0
        %799 = vmatpush.msra.mxu0 0.0
        %800 = vmatpush.msra.mxu0 0.0
        %801 = vmatpush.msra.mxu0 0.0
        %802 = vmatpush.msra.mxu0 %v783
        %803 = vmatmul.f32.gmra.mxu0 %v780
        %v804 = vpop.f32.mrf.mxu0
        %v805 = vadd.f32 0.0, %v804
        %806 = vdwg.mxu0
        %807 = vmatpush.msra.mxu0 0.0
        %808 = vmatpush.msra.mxu0 0.0
        %809 = vmatpush.msra.mxu0 0.0
        %810 = vmatpush.msra.mxu0 0.0
        %811 = vmatpush.msra.mxu0 0.0
        %812 = vmatpush.msra.mxu0 0.0
        %813 = vmatpush.msra.mxu0 0.0
        %814 = vmatpush.msra.mxu0 0.0
        %815 = vmatpush.msra.mxu0 0.0
        %816 = vmatpush.msra.mxu0 0.0
        %817 = vmatpush.msra.mxu0 0.0
        %818 = vmatpush.msra.mxu0 0.0
        %819 = vmatpush.msra.mxu0 0.0
        %820 = vmatpush.msra.mxu0 0.0
        %821 = vmatpush.msra.mxu0 0.0
        %822 = vmatpush.msra.mxu0 %v785
        %823 = vmatmul.f32.gmra.mxu0 %v780
        %v824 = vpop.f32.mrf.mxu0
        %v825 = vadd.f32 0.0, %v824
        %826 = vdwg.mxu0
        %v828 = vsel %vm778, %v766, 0
        %v830 = vsel %vm782, %v752, 0
        %v832 = vsel %vm782, %v753, 0
        %834 = vmatpush.msra.mxu0 0.0
        %835 = vmatpush.msra.mxu0 0.0
        %836 = vmatpush.msra.mxu0 0.0
        %837 = vmatpush.msra.mxu0 0.0
        %838 = vmatpush.msra.mxu0 0.0
        %839 = vmatpush.msra.mxu0 0.0
        %840 = vmatpush.msra.mxu0 0.0
        %841 = vmatpush.msra.mxu0 0.0
        %842 = vmatpush.msra.mxu0 0.0
        %843 = vmatpush.msra.mxu0 0.0
        %844 = vmatpush.msra.mxu0 0.0
        %845 = vmatpush.msra.mxu0 0.0
        %846 = vmatpush.msra.mxu0 0.0
        %847 = vmatpush.msra.mxu0 0.0
        %848 = vmatpush.msra.mxu0 0.0
        %849 = vmatpush.msra.mxu0 %v830
        %850 = vmatmul.f32.gmra.mxu0 %v828
        %v851 = vpop.f32.mrf.mxu0
        %v852 = vadd.f32 %v805, %v851
        %853 = vdwg.mxu0
        %854 = vmatpush.msra.mxu0 0.0
        %855 = vmatpush.msra.mxu0 0.0
        %856 = vmatpush.msra.mxu0 0.0
        %857 = vmatpush.msra.mxu0 0.0
        %858 = vmatpush.msra.mxu0 0.0
        %859 = vmatpush.msra.mxu0 0.0
        %860 = vmatpush.msra.mxu0 0.0
        %861 = vmatpush.msra.mxu0 0.0
        %862 = vmatpush.msra.mxu0 0.0
        %863 = vmatpush.msra.mxu0 0.0
        %864 = vmatpush.msra.mxu0 0.0
        %865 = vmatpush.msra.mxu0 0.0
        %866 = vmatpush.msra.mxu0 0.0
        %867 = vmatpush.msra.mxu0 0.0
        %868 = vmatpush.msra.mxu0 0.0
        %869 = vmatpush.msra.mxu0 %v832
        %870 = vmatmul.f32.gmra.mxu0 %v828
        %v871 = vpop.f32.mrf.mxu0
        %v872 = vadd.f32 %v825, %v871
        %873 = vdwg.mxu0
        %s874 = scalar_lea.vmem %s622, 16 [#allocation5]
        %v875 = vld [vmem:[%s874] sm:$0xff]
        %876 = vrot.lane.b32.xlu0 %v752, 126
        %v877 = vpop.permute.xlu0 %876
        %878 = vrot.lane.b32.xlu0 %v753, 126
        %v879 = vpop.permute.xlu0 %878
        %880 = vrot.lane.b32.xlu0 %v765, 126
        %v881 = vpop.permute.xlu0 %880
        %vm882 = vcmask 1031168
        %v883 = vsel %vm882, %v877, %v879
        %v884 = vsel %vm882, %v879, %v881
        %v886 = vsel %vm778, %v875, 0
        %v888 = vsel %vm782, %v883, 0
        %v890 = vsel %vm782, %v884, 0
        %892 = vmatpush.msra.mxu0 0.0
        %893 = vmatpush.msra.mxu0 0.0
        %894 = vmatpush.msra.mxu0 0.0
        %895 = vmatpush.msra.mxu0 0.0
        %896 = vmatpush.msra.mxu0 0.0
        %897 = vmatpush.msra.mxu0 0.0
        %898 = vmatpush.msra.mxu0 0.0
        %899 = vmatpush.msra.mxu0 0.0
        %900 = vmatpush.msra.mxu0 0.0
        %901 = vmatpush.msra.mxu0 0.0
        %902 = vmatpush.msra.mxu0 0.0
        %903 = vmatpush.msra.mxu0 0.0
        %904 = vmatpush.msra.mxu0 0.0
        %905 = vmatpush.msra.mxu0 0.0
        %906 = vmatpush.msra.mxu0 0.0
        %907 = vmatpush.msra.mxu0 %v888
        %908 = vmatmul.f32.gmra.mxu0 %v886
        %v909 = vpop.f32.mrf.mxu0
        %v910 = vadd.f32 0.0, %v909
        %911 = vdwg.mxu0
        %912 = vmatpush.msra.mxu0 0.0
        %913 = vmatpush.msra.mxu0 0.0
        %914 = vmatpush.msra.mxu0 0.0
        %915 = vmatpush.msra.mxu0 0.0
        %916 = vmatpush.msra.mxu0 0.0
        %917 = vmatpush.msra.mxu0 0.0
        %918 = vmatpush.msra.mxu0 0.0
        %919 = vmatpush.msra.mxu0 0.0
        %920 = vmatpush.msra.mxu0 0.0
        %921 = vmatpush.msra.mxu0 0.0
        %922 = vmatpush.msra.mxu0 0.0
        %923 = vmatpush.msra.mxu0 0.0
        %924 = vmatpush.msra.mxu0 0.0
        %925 = vmatpush.msra.mxu0 0.0
        %926 = vmatpush.msra.mxu0 0.0
        %927 = vmatpush.msra.mxu0 %v890
        %928 = vmatmul.f32.gmra.mxu0 %v886
        %v929 = vpop.f32.mrf.mxu0
        %v930 = vadd.f32 0.0, %v929
        %931 = vdwg.mxu0
        %v932 = vadd.f32 %v852, %v910
        %v933 = vadd.f32 %v872, %v930
        %s934 = scalar_lea.vmem %s622, 24 [#allocation5]
        %v935 = vld [vmem:[%s934] sm:$0xff]
        %936 = vrot.lane.b32.xlu0 %v752, 96
        %v937 = vpop.permute.xlu0 %936
        %938 = vrot.lane.b32.xlu0 %v753, 96
        %v939 = vpop.permute.xlu0 %938
        %940 = vrot.lane.b32.xlu0 %v765, 96
        %v941 = vpop.permute.xlu0 %940
        %vm942 = vcmask 785408
        %v943 = vsel %vm942, %v937, %v939
        %v944 = vsel %vm942, %v939, %v941
        %v946 = vsel %vm778, %v935, 0
        %v948 = vsel %vm782, %v943, 0
        %v950 = vsel %vm782, %v944, 0
        %952 = vmatpush.msra.mxu0 0.0
        %953 = vmatpush.msra.mxu0 0.0
        %954 = vmatpush.msra.mxu0 0.0
        %955 = vmatpush.msra.mxu0 0.0
        %956 = vmatpush.msra.mxu0 0.0
        %957 = vmatpush.msra.mxu0 0.0
        %958 = vmatpush.msra.mxu0 0.0
        %959 = vmatpush.msra.mxu0 0.0
        %960 = vmatpush.msra.mxu0 0.0
        %961 = vmatpush.msra.mxu0 0.0
        %962 = vmatpush.msra.mxu0 0.0
        %963 = vmatpush.msra.mxu0 0.0
        %964 = vmatpush.msra.mxu0 0.0
        %965 = vmatpush.msra.mxu0 0.0
        %966 = vmatpush.msra.mxu0 0.0
        %967 = vmatpush.msra.mxu0 %v948
        %968 = vmatmul.f32.gmra.mxu0 %v946
        %v969 = vpop.f32.mrf.mxu0
        %v970 = vadd.f32 0.0, %v969
        %971 = vdwg.mxu0
        %972 = vmatpush.msra.mxu0 0.0
        %973 = vmatpush.msra.mxu0 0.0
        %974 = vmatpush.msra.mxu0 0.0
        %975 = vmatpush.msra.mxu0 0.0
        %976 = vmatpush.msra.mxu0 0.0
        %977 = vmatpush.msra.mxu0 0.0
        %978 = vmatpush.msra.mxu0 0.0
        %979 = vmatpush.msra.mxu0 0.0
        %980 = vmatpush.msra.mxu0 0.0
        %981 = vmatpush.msra.mxu0 0.0
        %982 = vmatpush.msra.mxu0 0.0
        %983 = vmatpush.msra.mxu0 0.0
        %984 = vmatpush.msra.mxu0 0.0
        %985 = vmatpush.msra.mxu0 0.0
        %986 = vmatpush.msra.mxu0 0.0
        %987 = vmatpush.msra.mxu0 %v950
        %988 = vmatmul.f32.gmra.mxu0 %v946
        %v989 = vpop.f32.mrf.mxu0
        %v990 = vadd.f32 0.0, %v989
        %991 = vdwg.mxu0
        %v992 = vadd.f32 %v932, %v970
        %v993 = vadd.f32 %v933, %v990
        %s994 = scalar_lea.vmem %s622, 32 [#allocation5]
        %v995 = vld [vmem:[%s994] sm:$0xff]
        %996 = vrot.lane.b32.xlu0 %v752, 95
        %v997 = vpop.permute.xlu0 %996
        %998 = vrot.lane.b32.xlu0 %v753, 95
        %v999 = vpop.permute.xlu0 %998
        %1000 = vrot.lane.b32.xlu0 %v765, 95
        %v1001 = vpop.permute.xlu0 %1000
        %vm1002 = vcmask 777216
        %v1003 = vsel %vm1002, %v997, %v999
        %v1004 = vsel %vm1002, %v999, %v1001
        %v1006 = vsel %vm778, %v995, 0
        %v1008 = vsel %vm782, %v1003, 0
        %v1010 = vsel %vm782, %v1004, 0
        %1012 = vmatpush.msra.mxu0 0.0
        %1013 = vmatpush.msra.mxu0 0.0
        %1014 = vmatpush.msra.mxu0 0.0
        %1015 = vmatpush.msra.mxu0 0.0
        %1016 = vmatpush.msra.mxu0 0.0
        %1017 = vmatpush.msra.mxu0 0.0
        %1018 = vmatpush.msra.mxu0 0.0
        %1019 = vmatpush.msra.mxu0 0.0
        %1020 = vmatpush.msra.mxu0 0.0
        %1021 = vmatpush.msra.mxu0 0.0
        %1022 = vmatpush.msra.mxu0 0.0
        %1023 = vmatpush.msra.mxu0 0.0
        %1024 = vmatpush.msra.mxu0 0.0
        %1025 = vmatpush.msra.mxu0 0.0
        %1026 = vmatpush.msra.mxu0 0.0
        %1027 = vmatpush.msra.mxu0 %v1008
        %1028 = vmatmul.f32.gmra.mxu0 %v1006
        %v1029 = vpop.f32.mrf.mxu0
        %v1030 = vadd.f32 0.0, %v1029
        %1031 = vdwg.mxu0
        %1032 = vmatpush.msra.mxu0 0.0
        %1033 = vmatpush.msra.mxu0 0.0
        %1034 = vmatpush.msra.mxu0 0.0
        %1035 = vmatpush.msra.mxu0 0.0
        %1036 = vmatpush.msra.mxu0 0.0
        %1037 = vmatpush.msra.mxu0 0.0
        %1038 = vmatpush.msra.mxu0 0.0
        %1039 = vmatpush.msra.mxu0 0.0
        %1040 = vmatpush.msra.mxu0 0.0
        %1041 = vmatpush.msra.mxu0 0.0
        %1042 = vmatpush.msra.mxu0 0.0
        %1043 = vmatpush.msra.mxu0 0.0
        %1044 = vmatpush.msra.mxu0 0.0
        %1045 = vmatpush.msra.mxu0 0.0
        %1046 = vmatpush.msra.mxu0 0.0
        %1047 = vmatpush.msra.mxu0 %v1010
        %1048 = vmatmul.f32.gmra.mxu0 %v1006
        %v1049 = vpop.f32.mrf.mxu0
        %v1050 = vadd.f32 0.0, %v1049
        %1051 = vdwg.mxu0
        %v1052 = vadd.f32 %v992, %v1030
        %v1053 = vadd.f32 %v993, %v1050
        %s1054 = scalar_lea.vmem %s622, 40 [#allocation5]
        %v1055 = vld [vmem:[%s1054] sm:$0xff]
        %1056 = vrot.lane.b32.xlu0 %v752, 94
        %v1057 = vpop.permute.xlu0 %1056
        %1058 = vrot.lane.b32.xlu0 %v753, 94
        %v1059 = vpop.permute.xlu0 %1058
        %1060 = vrot.lane.b32.xlu0 %v765, 94
        %v1061 = vpop.permute.xlu0 %1060
        %vm1062 = vcmask 769024
        %v1063 = vsel %vm1062, %v1057, %v1059
        %v1064 = vsel %vm1062, %v1059, %v1061
        %v1066 = vsel %vm778, %v1055, 0
        %v1068 = vsel %vm782, %v1063, 0
        %v1070 = vsel %vm782, %v1064, 0
        %1072 = vmatpush.msra.mxu0 0.0
        %1073 = vmatpush.msra.mxu0 0.0
        %1074 = vmatpush.msra.mxu0 0.0
        %1075 = vmatpush.msra.mxu0 0.0
        %1076 = vmatpush.msra.mxu0 0.0
        %1077 = vmatpush.msra.mxu0 0.0
        %1078 = vmatpush.msra.mxu0 0.0
        %1079 = vmatpush.msra.mxu0 0.0
        %1080 = vmatpush.msra.mxu0 0.0
        %1081 = vmatpush.msra.mxu0 0.0
        %1082 = vmatpush.msra.mxu0 0.0
        %1083 = vmatpush.msra.mxu0 0.0
        %1084 = vmatpush.msra.mxu0 0.0
        %1085 = vmatpush.msra.mxu0 0.0
        %1086 = vmatpush.msra.mxu0 0.0
        %1087 = vmatpush.msra.mxu0 %v1068
        %1088 = vmatmul.f32.gmra.mxu0 %v1066
        %v1089 = vpop.f32.mrf.mxu0
        %v1090 = vadd.f32 0.0, %v1089
        %1091 = vdwg.mxu0
        %1092 = vmatpush.msra.mxu0 0.0
        %1093 = vmatpush.msra.mxu0 0.0
        %1094 = vmatpush.msra.mxu0 0.0
        %1095 = vmatpush.msra.mxu0 0.0
        %1096 = vmatpush.msra.mxu0 0.0
        %1097 = vmatpush.msra.mxu0 0.0
        %1098 = vmatpush.msra.mxu0 0.0
        %1099 = vmatpush.msra.mxu0 0.0
        %1100 = vmatpush.msra.mxu0 0.0
        %1101 = vmatpush.msra.mxu0 0.0
        %1102 = vmatpush.msra.mxu0 0.0
        %1103 = vmatpush.msra.mxu0 0.0
        %1104 = vmatpush.msra.mxu0 0.0
        %1105 = vmatpush.msra.mxu0 0.0
        %1106 = vmatpush.msra.mxu0 0.0
        %1107 = vmatpush.msra.mxu0 %v1070
        %1108 = vmatmul.f32.gmra.mxu0 %v1066
        %v1109 = vpop.f32.mrf.mxu0
        %v1110 = vadd.f32 0.0, %v1109
        %1111 = vdwg.mxu0
        %v1112 = vadd.f32 %v1052, %v1090
        %v1113 = vadd.f32 %v1053, %v1110
        %s1114 = scalar_lea.vmem %s622, 48 [#allocation5]
        %v1115 = vld [vmem:[%s1114] sm:$0xff]
        %1116 = vrot.lane.b32.xlu0 %v752, 64
        %v1117 = vpop.permute.xlu0 %1116
        %1118 = vrot.lane.b32.xlu0 %v753, 64
        %v1119 = vpop.permute.xlu0 %1118
        %1120 = vrot.lane.b32.xlu0 %v765, 64
        %v1121 = vpop.permute.xlu0 %1120
        %vm1122 = vcmask 523264
        %v1123 = vsel %vm1122, %v1117, %v1119
        %v1124 = vsel %vm1122, %v1119, %v1121
        %v1126 = vsel %vm778, %v1115, 0
        %v1128 = vsel %vm782, %v1123, 0
        %v1130 = vsel %vm782, %v1124, 0
        %1132 = vmatpush.msra.mxu0 0.0
        %1133 = vmatpush.msra.mxu0 0.0
        %1134 = vmatpush.msra.mxu0 0.0
        %1135 = vmatpush.msra.mxu0 0.0
        %1136 = vmatpush.msra.mxu0 0.0
        %1137 = vmatpush.msra.mxu0 0.0
        %1138 = vmatpush.msra.mxu0 0.0
        %1139 = vmatpush.msra.mxu0 0.0
        %1140 = vmatpush.msra.mxu0 0.0
        %1141 = vmatpush.msra.mxu0 0.0
        %1142 = vmatpush.msra.mxu0 0.0
        %1143 = vmatpush.msra.mxu0 0.0
        %1144 = vmatpush.msra.mxu0 0.0
        %1145 = vmatpush.msra.mxu0 0.0
        %1146 = vmatpush.msra.mxu0 0.0
        %1147 = vmatpush.msra.mxu0 %v1128
        %1148 = vmatmul.f32.gmra.mxu0 %v1126
        %v1149 = vpop.f32.mrf.mxu0
        %v1150 = vadd.f32 0.0, %v1149
        %1151 = vdwg.mxu0
        %1152 = vmatpush.msra.mxu0 0.0
        %1153 = vmatpush.msra.mxu0 0.0
        %1154 = vmatpush.msra.mxu0 0.0
        %1155 = vmatpush.msra.mxu0 0.0
        %1156 = vmatpush.msra.mxu0 0.0
        %1157 = vmatpush.msra.mxu0 0.0
        %1158 = vmatpush.msra.mxu0 0.0
        %1159 = vmatpush.msra.mxu0 0.0
        %1160 = vmatpush.msra.mxu0 0.0
        %1161 = vmatpush.msra.mxu0 0.0
        %1162 = vmatpush.msra.mxu0 0.0
        %1163 = vmatpush.msra.mxu0 0.0
        %1164 = vmatpush.msra.mxu0 0.0
        %1165 = vmatpush.msra.mxu0 0.0
        %1166 = vmatpush.msra.mxu0 0.0
        %1167 = vmatpush.msra.mxu0 %v1130
        %1168 = vmatmul.f32.gmra.mxu0 %v1126
        %v1169 = vpop.f32.mrf.mxu0
        %v1170 = vadd.f32 0.0, %v1169
        %1171 = vdwg.mxu0
        %v1172 = vadd.f32 %v1112, %v1150
        %v1173 = vadd.f32 %v1113, %v1170
        %s1174 = scalar_lea.vmem %s622, 56 [#allocation5]
        %v1175 = vld [vmem:[%s1174] sm:$0xff]
        %1176 = vrot.lane.b32.xlu0 %v752, 63
        %v1177 = vpop.permute.xlu0 %1176
        %1178 = vrot.lane.b32.xlu0 %v753, 63
        %v1179 = vpop.permute.xlu0 %1178
        %1180 = vrot.lane.b32.xlu0 %v765, 63
        %v1181 = vpop.permute.xlu0 %1180
        %vm1182 = vcmask 515072
        %v1183 = vsel %vm1182, %v1177, %v1179
        %v1184 = vsel %vm1182, %v1179, %v1181
        %v1186 = vsel %vm778, %v1175, 0
        %v1188 = vsel %vm782, %v1183, 0
        %v1190 = vsel %vm782, %v1184, 0
        %1192 = vmatpush.msra.mxu0 0.0
        %1193 = vmatpush.msra.mxu0 0.0
        %1194 = vmatpush.msra.mxu0 0.0
        %1195 = vmatpush.msra.mxu0 0.0
        %1196 = vmatpush.msra.mxu0 0.0
        %1197 = vmatpush.msra.mxu0 0.0
        %1198 = vmatpush.msra.mxu0 0.0
        %1199 = vmatpush.msra.mxu0 0.0
        %1200 = vmatpush.msra.mxu0 0.0
        %1201 = vmatpush.msra.mxu0 0.0
        %1202 = vmatpush.msra.mxu0 0.0
        %1203 = vmatpush.msra.mxu0 0.0
        %1204 = vmatpush.msra.mxu0 0.0
        %1205 = vmatpush.msra.mxu0 0.0
        %1206 = vmatpush.msra.mxu0 0.0
        %1207 = vmatpush.msra.mxu0 %v1188
        %1208 = vmatmul.f32.gmra.mxu0 %v1186
        %v1209 = vpop.f32.mrf.mxu0
        %v1210 = vadd.f32 0.0, %v1209
        %1211 = vdwg.mxu0
        %1212 = vmatpush.msra.mxu0 0.0
        %1213 = vmatpush.msra.mxu0 0.0
        %1214 = vmatpush.msra.mxu0 0.0
        %1215 = vmatpush.msra.mxu0 0.0
        %1216 = vmatpush.msra.mxu0 0.0
        %1217 = vmatpush.msra.mxu0 0.0
        %1218 = vmatpush.msra.mxu0 0.0
        %1219 = vmatpush.msra.mxu0 0.0
        %1220 = vmatpush.msra.mxu0 0.0
        %1221 = vmatpush.msra.mxu0 0.0
        %1222 = vmatpush.msra.mxu0 0.0
        %1223 = vmatpush.msra.mxu0 0.0
        %1224 = vmatpush.msra.mxu0 0.0
        %1225 = vmatpush.msra.mxu0 0.0
        %1226 = vmatpush.msra.mxu0 0.0
        %1227 = vmatpush.msra.mxu0 %v1190
        %1228 = vmatmul.f32.gmra.mxu0 %v1186
        %v1229 = vpop.f32.mrf.mxu0
        %v1230 = vadd.f32 0.0, %v1229
        %1231 = vdwg.mxu0
        %v1232 = vadd.f32 %v1172, %v1210
        %v1233 = vadd.f32 %v1173, %v1230
        %s1234 = scalar_lea.vmem %s622, 64 [#allocation5]
        %v1235 = vld [vmem:[%s1234] sm:$0xff]
        %1236 = vrot.lane.b32.xlu0 %v752, 62
        %v1237 = vpop.permute.xlu0 %1236
        %1238 = vrot.lane.b32.xlu0 %v753, 62
        %v1239 = vpop.permute.xlu0 %1238
        %1240 = vrot.lane.b32.xlu0 %v765, 62
        %v1241 = vpop.permute.xlu0 %1240
        %vm1242 = vcmask 506880
        %v1243 = vsel %vm1242, %v1237, %v1239
        %v1244 = vsel %vm1242, %v1239, %v1241
        %v1246 = vsel %vm778, %v1235, 0
        %v1248 = vsel %vm782, %v1243, 0
        %v1250 = vsel %vm782, %v1244, 0
        %1252 = vmatpush.msra.mxu0 0.0
        %1253 = vmatpush.msra.mxu0 0.0
        %1254 = vmatpush.msra.mxu0 0.0
        %1255 = vmatpush.msra.mxu0 0.0
        %1256 = vmatpush.msra.mxu0 0.0
        %1257 = vmatpush.msra.mxu0 0.0
        %1258 = vmatpush.msra.mxu0 0.0
        %1259 = vmatpush.msra.mxu0 0.0
        %1260 = vmatpush.msra.mxu0 0.0
        %1261 = vmatpush.msra.mxu0 0.0
        %1262 = vmatpush.msra.mxu0 0.0
        %1263 = vmatpush.msra.mxu0 0.0
        %1264 = vmatpush.msra.mxu0 0.0
        %1265 = vmatpush.msra.mxu0 0.0
        %1266 = vmatpush.msra.mxu0 0.0
        %1267 = vmatpush.msra.mxu0 %v1248
        %1268 = vmatmul.f32.gmra.mxu0 %v1246
        %v1269 = vpop.f32.mrf.mxu0
        %v1270 = vadd.f32 0.0, %v1269
        %1271 = vdwg.mxu0
        %1272 = vmatpush.msra.mxu0 0.0
        %1273 = vmatpush.msra.mxu0 0.0
        %1274 = vmatpush.msra.mxu0 0.0
        %1275 = vmatpush.msra.mxu0 0.0
        %1276 = vmatpush.msra.mxu0 0.0
        %1277 = vmatpush.msra.mxu0 0.0
        %1278 = vmatpush.msra.mxu0 0.0
        %1279 = vmatpush.msra.mxu0 0.0
        %1280 = vmatpush.msra.mxu0 0.0
        %1281 = vmatpush.msra.mxu0 0.0
        %1282 = vmatpush.msra.mxu0 0.0
        %1283 = vmatpush.msra.mxu0 0.0
        %1284 = vmatpush.msra.mxu0 0.0
        %1285 = vmatpush.msra.mxu0 0.0
        %1286 = vmatpush.msra.mxu0 0.0
        %1287 = vmatpush.msra.mxu0 %v1250
        %1288 = vmatmul.f32.gmra.mxu0 %v1246
        %v1289 = vpop.f32.mrf.mxu0
        %v1290 = vadd.f32 0.0, %v1289
        %1291 = vdwg.mxu0
        %v1292 = vadd.f32 %v1232, %v1270
        %v1293 = vadd.f32 %v1233, %v1290
        %v1294 = vlaneseq
        %v1295 = vand.u32 %v1294, 127
        %v1296 = vadd.s32 %v1295, 128
        %vm1297 = vcmp.lt.s32.totalorder %v1295, 0
        %v1298 = vsub.s32 0, %v1295
        %v1299 = vsel %vm1297, %v1298, %v1295
        %v1300 = vshrl.u32 %v1299, 5
        %v1301 = vand.u32 %v1299, 31
        %v1302 = vsub.s32 0, %v1301
        %v1303 = vsel %vm1297, %v1302, %v1301
        %vm1304 = vcmp.lt.s32.totalorder %v1296, 0
        %v1305 = vsub.s32 0, %v1296
        %v1306 = vsel %vm1304, %v1305, %v1296
        %v1307 = vshrl.u32 %v1306, 5
        %v1308 = vand.u32 %v1306, 31
        %v1309 = vsub.s32 0, %v1308
        %v1310 = vsel %vm1304, %v1309, %v1308
        %vm1311 = vcmp.ne.s32.totalorder %v1303, 0
        %vm1312 = vcmp.ne.s32.totalorder %v1310, 0
        %vm1313 = vcmp.lt.s32.totalorder %v1303, 0
        %vm1314 = vcmp.lt.s32.totalorder %v1310, 0
        %vm1315 = vmand %vm1313, %vm1311
        %vm1316 = vmand %vm1314, %vm1312
        %v1317 = vadd.s32 %v1303, 32
        %v1318 = vadd.s32 %v1310, 32
        %v1319 = vsel %vm1315, %v1317, %v1303
        %v1320 = vsel %vm1316, %v1318, %v1310
        %vm1321 = vcmp.lt.s32.totalorder %v1319, 16
        %vm1322 = vcmp.lt.s32.totalorder %v1320, 16
        %v1323 = vsel %vm1321, 1, 0
        %v1324 = vsel %vm1322, 1, 0
        %vm1325 = vcmp.eq.s32.totalorder %v1323, 1
        %vm1326 = vcmp.eq.s32.totalorder %v1324, 1
        %v1327 = vsel %vm1325, %v1292, 0.0
        %v1328 = vsel %vm1326, %v1293, 0.0
        %v1329 = vld [vmem:[#allocation2] sm:$0xff]
        %v1330 = vadd.f32 %v1327, %v1328
        %1331 = vadd.xlane.f32.xlu0 %v1330
        %v1332 = vpop.xlane.xlu0 %1331
        %v1333 = vadd.f32 %v1329, %v1332
        %vm1334 = vcmask 7168
        %1335 = vst.msk [vmem:[#allocation2] sm:$0xff] %vm1334, %v1333
        %v1336 = vld [vmem:[#allocation3] sm:$0xff]
        %v1337 = vmul.f32 %v1327, %v1327
        %v1338 = vmul.f32 %v1328, %v1328
        %v1339 = vadd.f32 %v1337, %v1338
        %1340 = vadd.xlane.f32.xlu0 %v1339
        %v1341 = vpop.xlane.xlu0 %1340
        %v1342 = vadd.f32 %v1336, %v1341
        %1343 = vst.msk [vmem:[#allocation3] sm:$0xff] %vm1334, %v1342
        %1344 = vst [vmem:[%s708] sm:$0xff] %v1292
        %1345 = vst [vmem:[%s708 + $0x8] sm:$0xff] %v1293
        %p1346 = scmp.eq.s32.totalorder %s24, 1
        // Predicated region
        $region141: #{conv_layer_pallas.2} parent=127 // pred_check
          %p1347 = pneg %p1346
        $region142: #{conv_layer_pallas.2} parent=127 // pred_check_branch
          %1349 = sbr.rel (%p1347) target = $region144
        $region143: #{conv_layer_pallas.2} parent=127 // pred_region
          %v1350 = vld [vmem:[#allocation2] sm:$0xff]
          %v1351 = vmul.f32 %v1350, 0.00390625
          %v1352 = vld [vmem:[#allocation3] sm:$0xff]
          %v1353 = vmul.f32 %v1352, 0.00390625
          %v1354 = vmul.f32 %v1351, %v1351
          %v1355 = vsub.f32 %v1353, %v1354
          %v1356 = vmax.f32 %v1355, 0.0
          %1357 = vst.msk [vmem:[%s717] sm:$0xff] %vm1334, %v1351
          %v1358 = vadd.f32 %v1356, 1e-05
          %v1359 = vrsqrt.pop %v1358
          %v1360 = vmul.f32 %v1359, %v1358
          %v1361 = vmul.f32 %v1360, %v1359
          %v1362 = vmul.f32 0.5, %v1361
          %v1363 = vsub.f32 1.5, %v1362
          %v1364 = vmul.f32 %v1359, %v1363
          %vm1365 = vweird.f32 %v1358
          %vm1366 = vweird.f32 %v1359
          %vm1367 = vmor %vm1365, %vm1366
          %v1368 = vsel %vm1367, %v1359, %v1364
          %1369 = vst.msk [vmem:[%s725] sm:$0xff] %vm1334, %v1368
        $region144: #{conv_layer_pallas.2} parent=127 // pred_fallthru
          _
        %s1370 = smul.u32 2, %s24
        %p1371 = scmp.lt.s32.totalorder %s22, 1
        %s1372 = scalar_select %p1371, %s22, 1
        %p1373 = scmp.lt.s32.totalorder %s23, 1
        %s1374 = scalar_select %p1373, %s23, 1
        %p1375 = scmp.lt.s32.totalorder %s1370, 3
        %s1376 = scalar_select %p1375, %s1370, 3
        %s1377 = smul.addr %s1374, 4
        %s1378 = sadd.s32 %s1376, %s1377
        %s1379 = smul.addr %s1372, 8
        %s1380 = sadd.s32 %s1378, %s1379
        %s1381 = smul.addr %s1380, 8
        %s1382 = scalar_lea.vmem %s3, %s1381
        %p1383 = scmp.lt.s32.totalorder %s22, 1
        %s1384 = scalar_select %p1383, %s22, 1
        %p1385 = scmp.lt.s32.totalorder %s23, 1
        %s1386 = scalar_select %p1385, %s23, 1
        %s1387 = smul.addr %s1384, 2
        %s1388 = sadd.s32 %s1386, %s1387
        %s1389 = smul.addr %s1388, 8
        %s1390 = scalar_lea.vmem %s4, %s1389
        %p1391 = scmp.lt.s32.totalorder %s22, 1
        %s1392 = scalar_select %p1391, %s22, 1
        %p1393 = scmp.lt.s32.totalorder %s23, 1
        %s1394 = scalar_select %p1393, %s23, 1
        %s1395 = smul.addr %s1392, 2
        %s1396 = sadd.s32 %s1394, %s1395
        %s1397 = smul.addr %s1396, 8
        %s1398 = scalar_lea.vmem %s5, %s1397
        // Predicated region
        $region145: #{conv_layer_pallas.2} parent=127 // pred_check
          %p1399 = pneg %p140
        $region146: #{conv_layer_pallas.2} parent=127 // pred_check_branch
          %1401 = sbr.rel (%p1399) target = $region148
        $region147: #{conv_layer_pallas.2} parent=127 // pred_region
          %s1402 = smul.u32 2, %s24
        $region148: #{conv_layer_pallas.2} parent=127 // pred_fallthru
          _
        // Predicated region
        $region149: #{conv_layer_pallas.2} parent=127 // pred_check
          %p1403 = pneg %p168
        $region150: #{conv_layer_pallas.2} parent=127 // pred_check_branch
          %1405 = sbr.rel (%p1403) target = $region152
        $region151: #{conv_layer_pallas.2} parent=127 // pred_region
          _
        $region152: #{conv_layer_pallas.2} parent=127 // pred_fallthru
          _
        // Predicated region
        $region153: #{conv_layer_pallas.2} parent=127 // pred_check
          %p1406 = pneg %p196
        $region154: #{conv_layer_pallas.2} parent=127 // pred_check_branch
          %1408 = sbr.rel (%p1406) target = $region156
        $region155: #{conv_layer_pallas.2} parent=127 // pred_region
          _
        $region156: #{conv_layer_pallas.2} parent=127 // pred_fallthru
          _
      $region128: #{conv_layer_pallas.2} parent=5 // pred_fallthru
        _
      %p1409 = scmp.le.s32.totalorder 2, %s12
      // Predicated region
      $region157: #{conv_layer_pallas.2} parent=5 // pred_check
        %p1410 = pneg %p1409
      $region158: #{conv_layer_pallas.2} parent=5 // pred_check_branch
        %1412 = sbr.rel (%p1410) target = $region160
      $region159: #{conv_layer_pallas.2} parent=5 // pred_region
        %s1413 = ssub.s32 %s12, 2
        // Predicated region
        $region161: #{conv_layer_pallas.2} parent=159 // pred_check
          %p1414 = pneg %p146
        $region162: #{conv_layer_pallas.2} parent=159 // pred_check_branch
          %1416 = sbr.rel (%p1414) target = $region164
        $region163: #{conv_layer_pallas.2} parent=159 // pred_region
          %s1417 = smul.u32 2, %s27
          %p1418 = scmp.lt.s32.totalorder %s25, 1
          %s1419 = scalar_select %p1418, %s25, 1
          %p1420 = scmp.lt.s32.totalorder %s26, 1
          %s1421 = scalar_select %p1420, %s26, 1
          %p1422 = scmp.lt.s32.totalorder %s1417, 3
          %s1423 = scalar_select %p1422, %s1417, 3
          %s1424 = smul.addr %s1421, 4
          %s1425 = sadd.s32 %s1423, %s1424
          %s1426 = smul.addr %s1419, 8
          %s1427 = sadd.s32 %s1425, %s1426
          %s1428 = smul.addr %s1427, 8
          %s1429 = scalar_lea.vmem %s3, %s1428
        $region164: #{conv_layer_pallas.2} parent=159 // pred_fallthru
          _
        // Predicated region
        $region165: #{conv_layer_pallas.2} parent=159 // pred_check
          %p1430 = pneg %p174
        $region166: #{conv_layer_pallas.2} parent=159 // pred_check_branch
          %1432 = sbr.rel (%p1430) target = $region168
        $region167: #{conv_layer_pallas.2} parent=159 // pred_region
          %p1433 = scmp.lt.s32.totalorder %s25, 1
          %s1434 = scalar_select %p1433, %s25, 1
          %p1435 = scmp.lt.s32.totalorder %s26, 1
          %s1436 = scalar_select %p1435, %s26, 1
          %s1437 = smul.addr %s1434, 2
          %s1438 = sadd.s32 %s1436, %s1437
          %s1439 = smul.addr %s1438, 8
          %s1440 = scalar_lea.vmem %s4, %s1439
        $region168: #{conv_layer_pallas.2} parent=159 // pred_fallthru
          _
        // Predicated region
        $region169: #{conv_layer_pallas.2} parent=159 // pred_check
          %p1441 = pneg %p202
        $region170: #{conv_layer_pallas.2} parent=159 // pred_check_branch
          %1443 = sbr.rel (%p1441) target = $region172
        $region171: #{conv_layer_pallas.2} parent=159 // pred_region
          %p1444 = scmp.lt.s32.totalorder %s25, 1
          %s1445 = scalar_select %p1444, %s25, 1
          %p1446 = scmp.lt.s32.totalorder %s26, 1
          %s1447 = scalar_select %p1446, %s26, 1
          %s1448 = smul.addr %s1445, 2
          %s1449 = sadd.s32 %s1447, %s1448
          %s1450 = smul.addr %s1449, 8
          %s1451 = scalar_lea.vmem %s5, %s1450
        $region172: #{conv_layer_pallas.2} parent=159 // pred_fallthru
          _
      $region160: #{conv_layer_pallas.2} parent=5 // pred_fallthru
        _
    $region6: #{conv_layer_pallas.2} parent=1 // loop_footer
      %s16 = sadd.s32 1, %s12
    $region7: #{conv_layer_pallas.2} parent=1 // loop_footer_branch
      %11 = sbr.rel target = $region3
    $region8: #{conv_layer_pallas.2} parent=1 // loop_exit
      _

</llo_original>
